<compile_context>
chip_gen: v7x
topology: tpu7x:2x2x1
jax: 0.10.0
libtpu: 0.0.40
codegen_flags: <defaults>
</compile_context>

<pallas_src>
import math
import functools

import jax
import jax.numpy as jnp
import numpy as np
from jax.experimental import pallas as pl
from jax.experimental.pallas import tpu as pltpu


# ---------------------------------------------------------------------------
# In-kernel helpers (traced inside the Pallas kernel body)
# ---------------------------------------------------------------------------
def _layernorm(x, a, b, eps=1e-6):
    # Matches the PyTorch LayerNorm in the module:
    #   mean = x.mean(-1); std = x.std(-1)   (unbiased, /(N-1))
    #   a * (x - mean) / (std + eps) + b
    n = x.shape[-1]
    mean = jnp.mean(x, axis=-1, keepdims=True)
    d = x - mean
    var = jnp.sum(d * d, axis=-1, keepdims=True) * (1.0 / (n - 1))
    inv = pl.reciprocal(jnp.sqrt(var) + eps, approx=True)   # EUP, not VALU
    return a * (d * inv) + b


def _softmax_lastdim(s):
    m = jnp.max(s, axis=-1, keepdims=True)
    e = jnp.exp(s - m)
    denom = jnp.sum(e, axis=-1, keepdims=True)
    return e * pl.reciprocal(denom, approx=True)             # EUP, not VALU


# ---------------------------------------------------------------------------
# Pallas kernel: one grid step == one batch tile, full encoder layer fused.
# ---------------------------------------------------------------------------
def encoder_layer_kernel(
    x_ref, mask_ref,
    wq_ref, bq_ref, wk_ref, bk_ref, wv_ref, bv_ref, wo_ref, bo_ref,
    w1_ref, b1_ref, w2_ref, b2_ref,
    ln1a_ref, ln1b_ref, ln2a_ref, ln2b_ref,
    lnfa_ref, lnfb_ref,
    out_ref,
    q_scr, k_scr, v_scr, attn_scr,
    *, head_num, apply_final_norm, compute_dtype,
):
    f32 = jnp.float32
    Bt, S, D = x_ref.shape
    hd = D // head_num
    scale = 1.0 / math.sqrt(hd)

    x = x_ref[...]                              # (Bt, S, D) f32
    x2d = x.reshape(Bt * S, D)                  # collapse leading dims (no-op layout)
    m = mask_ref[...]                           # (Bt, 1, S) f32
    # Additive key-padding bias, computed once per tile (replaces H selects).
    mask_bias = jnp.where(m == 0, -1e9, 0.0)    # (Bt, 1, S) f32

    # ---- sublayer 0: x + self_attn(norm(x)) ----------------------------------
    xn = _layernorm(x2d, ln1a_ref[...], ln1b_ref[...])        # f32 (Bt*S, D)
    xn_c = xn.astype(compute_dtype)

    q = jnp.dot(xn_c, wq_ref[...], preferred_element_type=f32) + bq_ref[...]
    k = jnp.dot(xn_c, wk_ref[...], preferred_element_type=f32) + bk_ref[...]
    v = jnp.dot(xn_c, wv_ref[...], preferred_element_type=f32) + bv_ref[...]
    q = q * scale                                # fold 1/sqrt(hd) into Q once

    # Static (unrolled) loop over the batch tile; heads are batched per element.
    # TODO(synk): for long sequences, tile the KV axis flash-style (online
    # softmax with m/l/acc scratch) instead of materializing (H, S, S) scores.
    for b in range(Bt):
        rows = slice(b * S, (b + 1) * S)
        qb, kb, vb = q[rows], k[rows], v[rows]   # (S, D) f32

        # Head split (S, H*hd) -> (H, S, hd) via VMEM scratch (no concat/transpose).
        for h in range(head_num):
            cols = slice(h * hd, (h + 1) * hd)
            q_scr[h] = qb[:, cols].astype(compute_dtype)
            k_scr[h] = kb[:, cols].astype(compute_dtype)
            v_scr[h] = vb[:, cols].astype(compute_dtype)
        qh = q_scr[...]                          # (H, S, hd) compute_dtype
        kh = k_scr[...]
        vh = v_scr[...]

        # Head-batched attention: two 3-D MXU contractions, f32 accumulation.
        s = jnp.einsum("hqd,hkd->hqk", qh, kh, preferred_element_type=f32)
        s = s + mask_bias[b].reshape(1, 1, S)    # additive mask (kept in f32)
        p = _softmax_lastdim(s)                  # (H, S, S) f32
        pv = jnp.einsum("hqk,hkd->hqd", p.astype(compute_dtype), vh,
                        preferred_element_type=f32)          # (H, S, hd) f32

        # Scatter heads back into a (Bt*S, D) scratch (replaces concatenate).
        for h in range(head_num):
            attn_scr[b * S:(b + 1) * S, h * hd:(h + 1) * hd] = \
                pv[h].astype(compute_dtype)

    attn2d = attn_scr[...]                                       # (Bt*S, D)
    attn_o = jnp.dot(attn2d, wo_ref[...], preferred_element_type=f32) + bo_ref[...]
    x1 = x2d + attn_o                                            # residual (f32)

    # ---- sublayer 1: x1 + ffn(norm(x1)) ---------------------------------------
    xn2 = _layernorm(x1, ln2a_ref[...], ln2b_ref[...]).astype(compute_dtype)
    h1 = jnp.dot(xn2, w1_ref[...], preferred_element_type=f32) + b1_ref[...]
    h1 = jnp.maximum(h1, 0.0).astype(compute_dtype)              # ReLU
    ffn = jnp.dot(h1, w2_ref[...], preferred_element_type=f32) + b2_ref[...]
    y = x1 + ffn

    # Final Encoder LayerNorm, fused into the last layer's kernel.
    if apply_final_norm:
        y = _layernorm(y, lnfa_ref[...], lnfb_ref[...])

    out_ref[...] = y.reshape(Bt, S, D).astype(out_ref.dtype)


# ---------------------------------------------------------------------------
# Per-layer pallas_call wrapper
# ---------------------------------------------------------------------------
def _encoder_layer_call(x, mask, p, final_ln, *, head_num, batch_block,
                        compute_dtype):
    B, S, D = x.shape
    d_hidden = p["w1"].shape[1]
    assert D % head_num == 0
    assert B % batch_block == 0
    Bt = batch_block
    hd = D // head_num
    f32 = jnp.float32
    cdt = compute_dtype

    if final_ln is None:
        lnf_a = jnp.ones((1, D), f32)
        lnf_b = jnp.zeros((1, D), f32)
        apply_final = False
    else:
        lnf_a, lnf_b = final_ln["a"], final_ln["b"]
        apply_final = True

    const2d = lambda shape: pl.BlockSpec(shape, lambda b: (0, 0))

    in_specs = [
        pl.BlockSpec((Bt, S, D), lambda b: (b, 0, 0)),       # x
        pl.BlockSpec((Bt, 1, S), lambda b: (b, 0, 0)),       # mask
        const2d((D, D)), const2d((1, D)),                    # wq, bq
        const2d((D, D)), const2d((1, D)),                    # wk, bk
        const2d((D, D)), const2d((1, D)),                    # wv, bv
        const2d((D, D)), const2d((1, D)),                    # wo, bo
        const2d((D, d_hidden)), const2d((1, d_hidden)),      # w1, b1
        const2d((d_hidden, D)), const2d((1, D)),             # w2, b2
        const2d((1, D)), const2d((1, D)),                    # ln1 a/b
        const2d((1, D)), const2d((1, D)),                    # ln2 a/b
        const2d((1, D)), const2d((1, D)),                    # final ln a/b
    ]

    scratch_shapes = [
        pltpu.VMEM((head_num, S, hd), cdt),    # q heads
        pltpu.VMEM((head_num, S, hd), cdt),    # k heads
        pltpu.VMEM((head_num, S, hd), cdt),    # v heads
        pltpu.VMEM((Bt * S, D), cdt),          # merged attention output
    ]

    kernel = functools.partial(
        encoder_layer_kernel,
        head_num=head_num, apply_final_norm=apply_final, compute_dtype=cdt)

    flops = (8 * B * S * D * D            # q/k/v/o projections
             + 4 * B * S * S * D          # QK^T and PV
             + 4 * B * S * D * d_hidden)  # FFN
    transcendentals = B * head_num * S * S
    bytes_accessed = (2 * B * S * D * 4                       # x in + out (f32)
                      + (4 * D * D + 2 * D * d_hidden) * 2    # bf16 weights
                      + B * S * 4)                            # mask

    return pl.pallas_call(
        kernel,
        out_shape=jax.ShapeDtypeStruct((B, S, D), f32),
        grid=(B // Bt,),
        in_specs=in_specs,
        out_specs=pl.BlockSpec((Bt, S, D), lambda b: (b, 0, 0)),
        scratch_shapes=scratch_shapes,
        compiler_params=pltpu.CompilerParams(
            dimension_semantics=("parallel",),         # batch tiles independent
            vmem_limit_bytes=64 * 1024 * 1024,
        ),
        cost_estimate=pl.CostEstimate(
            flops=flops, transcendentals=transcendentals,
            bytes_accessed=bytes_accessed),
    )(
        x, mask,
        p["wq"].astype(cdt), p["bq"],
        p["wk"].astype(cdt), p["bk"],
        p["wv"].astype(cdt), p["bv"],
        p["wo"].astype(cdt), p["bo"],
        p["w1"].astype(cdt), p["b1"],
        p["w2"].astype(cdt), p["b2"],
        p["ln1_a"], p["ln1_b"], p["ln2_a"], p["ln2_b"],
        lnf_a, lnf_b,
    )


def encoder_forward(x, mask, layer_params, final_ln, *, head_num,
                    batch_block=None, compute_dtype=jnp.bfloat16):
    """Full Encoder: N fused encoder-layer kernels; final LayerNorm is fused
    into the last layer's kernel."""
    B = x.shape[0]
    if batch_block is None:
        batch_block = B        # fine for small batches; tune for large B/S/D
    n = len(layer_params)
    for i, p in enumerate(layer_params):
        is_last = (i == n - 1)
        x = _encoder_layer_call(
            x, mask, p, final_ln if is_last else None,
            head_num=head_num, batch_block=batch_block,
            compute_dtype=compute_dtype)
    return x


# ---------------------------------------------------------------------------
# Pure-JAX reference (mirror of the PyTorch forward; matmul inputs cast to the
# same compute dtype as the kernel so the comparison is apples-to-apples)
# ---------------------------------------------------------------------------
def encoder_ref(x, mask, layer_params, final_ln, *, head_num,
                compute_dtype=jnp.bfloat16):
    f32 = jnp.float32

    def ln(v, a, b, eps=1e-6):
        mean = jnp.mean(v, axis=-1, keepdims=True)
        var = jnp.sum((v - mean) ** 2, axis=-1, keepdims=True) / (v.shape[-1] - 1)
        return a * (v - mean) / (jnp.sqrt(var) + eps) + b

    def mm(a, w):
        return jnp.dot(a.astype(compute_dtype), w.astype(compute_dtype),
                       preferred_element_type=f32)

    B, S, D = x.shape
    hd = D // head_num
    for p in layer_params:
        xn = ln(x, p["ln1_a"], p["ln1_b"])
        q = mm(xn, p["wq"]) + p["bq"]
        k = mm(xn, p["wk"]) + p["bk"]
        v = mm(xn, p["wv"]) + p["bv"]
        q = q.reshape(B, S, head_num, hd).transpose(0, 2, 1, 3)
        k = k.reshape(B, S, head_num, hd).transpose(0, 2, 1, 3)
        v = v.reshape(B, S, head_num, hd).transpose(0, 2, 1, 3)
        scores = jnp.einsum("bhqd,bhkd->bhqk",
                            q.astype(compute_dtype), k.astype(compute_dtype),
                            preferred_element_type=f32) / math.sqrt(hd)
        m4 = mask[:, None, :, :]                         # (B,1,1,S)
        scores = jnp.where(m4 == 0, -1e9, scores)
        pa = jax.nn.softmax(scores, axis=-1)
        attn = jnp.einsum("bhqk,bhkd->bhqd",
                          pa.astype(compute_dtype), v.astype(compute_dtype),
                          preferred_element_type=f32)
        attn = attn.transpose(0, 2, 1, 3).reshape(B, S, D)
        attn = mm(attn, p["wo"]) + p["bo"]
        x1 = x + attn

        xn2 = ln(x1, p["ln2_a"], p["ln2_b"])
        h1 = jnp.maximum(mm(xn2, p["w1"]) + p["b1"], 0.0)
        ffn = mm(h1, p["w2"]) + p["b2"]
        x = x1 + ffn
    return ln(x, final_ln["a"], final_ln["b"])


# ---------------------------------------------------------------------------
if __name__ == "__main__":
    B, S, D = 2, 8, 32
    H = 4
    D_HIDDEN = 64
    N_LAYERS = 2

    key = jax.random.PRNGKey(0)

    def lin_init(k, fan_in, shape_w, shape_b):
        kw, kb = jax.random.split(k)
        bound = 1.0 / math.sqrt(fan_in)
        w = jax.random.uniform(kw, shape_w, jnp.float32, -bound, bound)
        b = jax.random.uniform(kb, shape_b, jnp.float32, -bound, bound)
        return w, b

    def make_layer_params(k):
        ks = jax.random.split(k, 6)
        wq, bq = lin_init(ks[0], D, (D, D), (1, D))
        wk, bk = lin_init(ks[1], D, (D, D), (1, D))
        wv, bv = lin_init(ks[2], D, (D, D), (1, D))
        wo, bo = lin_init(ks[3], D, (D, D), (1, D))
        w1, b1 = lin_init(ks[4], D, (D, D_HIDDEN), (1, D_HIDDEN))
        w2, b2 = lin_init(ks[5], D_HIDDEN, (D_HIDDEN, D), (1, D))
        return dict(
            wq=wq, bq=bq, wk=wk, bk=bk, wv=wv, bv=bv, wo=wo, bo=bo,
            w1=w1, b1=b1, w2=w2, b2=b2,
            ln1_a=jnp.ones((1, D), jnp.float32), ln1_b=jnp.zeros((1, D), jnp.float32),
            ln2_a=jnp.ones((1, D), jnp.float32), ln2_b=jnp.zeros((1, D), jnp.float32),
        )

    kx, km, *layer_keys = jax.random.split(key, 2 + N_LAYERS)
    layers = [make_layer_params(k) for k in layer_keys]
    final_ln = dict(a=jnp.ones((1, D), jnp.float32),
                    b=jnp.zeros((1, D), jnp.float32))

    x = jax.random.normal(kx, (B, S, D), jnp.float32)
    # key-padding mask: batch 0 keeps all 8 positions, batch 1 keeps first 6
    lens = jnp.array([8, 6])
    mask = (jnp.arange(S)[None, None, :] < lens[:, None, None]).astype(jnp.float32)

    out = encoder_forward(x, mask, layers, final_ln, head_num=H, batch_block=B)
    out = jax.block_until_ready(out)

    ref = encoder_ref(x, mask, layers, final_ln, head_num=H)
    np.testing.assert_allclose(np.asarray(out), np.asarray(ref),
                               atol=2e-2, rtol=2e-2)

    print("KERNEL_OK")
</pallas_src>

<mosaic_0001>
module attributes {stable_mosaic.version = 11 : i64} {
  func.func @encoder_layer_kernel(%arg0: i32, %arg1: memref<2x8x32xf32, #tpu.memory_space<vmem>>, %arg2: memref<2x1x8xf32, #tpu.memory_space<vmem>>, %arg3: memref<32x32xbf16, #tpu.memory_space<vmem>>, %arg4: memref<1x32xf32, #tpu.memory_space<vmem>>, %arg5: memref<32x32xbf16, #tpu.memory_space<vmem>>, %arg6: memref<1x32xf32, #tpu.memory_space<vmem>>, %arg7: memref<32x32xbf16, #tpu.memory_space<vmem>>, %arg8: memref<1x32xf32, #tpu.memory_space<vmem>>, %arg9: memref<32x32xbf16, #tpu.memory_space<vmem>>, %arg10: memref<1x32xf32, #tpu.memory_space<vmem>>, %arg11: memref<32x64xbf16, #tpu.memory_space<vmem>>, %arg12: memref<1x64xf32, #tpu.memory_space<vmem>>, %arg13: memref<64x32xbf16, #tpu.memory_space<vmem>>, %arg14: memref<1x32xf32, #tpu.memory_space<vmem>>, %arg15: memref<1x32xf32, #tpu.memory_space<vmem>>, %arg16: memref<1x32xf32, #tpu.memory_space<vmem>>, %arg17: memref<1x32xf32, #tpu.memory_space<vmem>>, %arg18: memref<1x32xf32, #tpu.memory_space<vmem>>, %arg19: memref<1x32xf32, #tpu.memory_space<vmem>>, %arg20: memref<1x32xf32, #tpu.memory_space<vmem>>, %arg21: memref<2x8x32xf32, #tpu.memory_space<vmem>>, %arg22: memref<4x8x8xbf16, #tpu.memory_space<vmem>>, %arg23: memref<4x8x8xbf16, #tpu.memory_space<vmem>>, %arg24: memref<4x8x8xbf16, #tpu.memory_space<vmem>>, %arg25: memref<16x32xbf16, #tpu.memory_space<vmem>>) attributes {dimension_semantics = [#tpu.dimension_semantics<parallel>], iteration_bounds = array<i64: 1>, scalar_prefetch = 0 : i64, scratch_operands = 4 : i64, tpu.core_type = #tpu.core_type<tc>, window_params = [{transform_indices = @transform_0, window_bounds = array<i64: 2, 8, 32>}, {transform_indices = @transform_1, window_bounds = array<i64: 2, 1, 8>}, {pipeline_mode = #tpu.pipeline_mode<synchronous>, transform_indices = @transform_2, window_bounds = array<i64: 32, 32>}, {pipeline_mode = #tpu.pipeline_mode<synchronous>, transform_indices = @transform_3, window_bounds = array<i64: 1, 32>}, {pipeline_mode = #tpu.pipeline_mode<synchronous>, transform_indices = @transform_4, window_bounds = array<i64: 32, 32>}, {pipeline_mode = #tpu.pipeline_mode<synchronous>, transform_indices = @transform_5, window_bounds = array<i64: 1, 32>}, {pipeline_mode = #tpu.pipeline_mode<synchronous>, transform_indices = @transform_6, window_bounds = array<i64: 32, 32>}, {pipeline_mode = #tpu.pipeline_mode<synchronous>, transform_indices = @transform_7, window_bounds = array<i64: 1, 32>}, {pipeline_mode = #tpu.pipeline_mode<synchronous>, transform_indices = @transform_8, window_bounds = array<i64: 32, 32>}, {pipeline_mode = #tpu.pipeline_mode<synchronous>, transform_indices = @transform_9, window_bounds = array<i64: 1, 32>}, {pipeline_mode = #tpu.pipeline_mode<synchronous>, transform_indices = @transform_10, window_bounds = array<i64: 32, 64>}, {pipeline_mode = #tpu.pipeline_mode<synchronous>, transform_indices = @transform_11, window_bounds = array<i64: 1, 64>}, {pipeline_mode = #tpu.pipeline_mode<synchronous>, transform_indices = @transform_12, window_bounds = array<i64: 64, 32>}, {pipeline_mode = #tpu.pipeline_mode<synchronous>, transform_indices = @transform_13, window_bounds = array<i64: 1, 32>}, {pipeline_mode = #tpu.pipeline_mode<synchronous>, transform_indices = @transform_14, window_bounds = array<i64: 1, 32>}, {pipeline_mode = #tpu.pipeline_mode<synchronous>, transform_indices = @transform_15, window_bounds = array<i64: 1, 32>}, {pipeline_mode = #tpu.pipeline_mode<synchronous>, transform_indices = @transform_16, window_bounds = array<i64: 1, 32>}, {pipeline_mode = #tpu.pipeline_mode<synchronous>, transform_indices = @transform_17, window_bounds = array<i64: 1, 32>}, {pipeline_mode = #tpu.pipeline_mode<synchronous>, transform_indices = @transform_18, window_bounds = array<i64: 1, 32>}, {pipeline_mode = #tpu.pipeline_mode<synchronous>, transform_indices = @transform_19, window_bounds = array<i64: 1, 32>}, {transform_indices = @transform_20, window_bounds = array<i64: 2, 8, 32>}]} {
    %c0 = arith.constant 0 : index
    %c0_0 = arith.constant 0 : index
    %c0_1 = arith.constant 0 : index
    %0 = vector.load %arg1[%c0, %c0_0, %c0_1] : memref<2x8x32xf32, #tpu.memory_space<vmem>>, vector<2x8x32xf32>
    %1 = vector.shape_cast %0 : vector<2x8x32xf32> to vector<16x32xf32>
    %c0_2 = arith.constant 0 : index
    %c0_3 = arith.constant 0 : index
    %c0_4 = arith.constant 0 : index
    %2 = vector.load %arg2[%c0_2, %c0_3, %c0_4] : memref<2x1x8xf32, #tpu.memory_space<vmem>>, vector<2x1x8xf32>
    %cst = arith.constant 0.000000e+00 : f32
    %3 = vector.broadcast %cst : f32 to vector<2x1x8xf32>
    %4 = arith.cmpf oeq, %2, %3 : vector<2x1x8xf32>
    %cst_5 = arith.constant -1.000000e+09 : f32
    %cst_6 = arith.constant 0.000000e+00 : f32
    %5 = vector.broadcast %cst_5 : f32 to vector<2x1x8xf32>
    %6 = vector.broadcast %cst_6 : f32 to vector<2x1x8xf32>
    %7 = arith.select %4, %5, %6 : vector<2x1x8xi1>, vector<2x1x8xf32>
    %c0_7 = arith.constant 0 : index
    %c0_8 = arith.constant 0 : index
    %8 = vector.load %arg15[%c0_7, %c0_8] : memref<1x32xf32, #tpu.memory_space<vmem>>, vector<1x32xf32>
    %c0_9 = arith.constant 0 : index
    %c0_10 = arith.constant 0 : index
    %9 = vector.load %arg16[%c0_9, %c0_10] : memref<1x32xf32, #tpu.memory_space<vmem>>, vector<1x32xf32>
    %cst_11 = arith.constant dense<0.000000e+00> : vector<16xf32>
    %10 = vector.multi_reduction <add>, %1, %cst_11 [1] : vector<16x32xf32> to vector<16xf32>
    %11 = vector.shape_cast %10 : vector<16xf32> to vector<16x1xf32>
    %cst_12 = arith.constant 3.200000e+01 : f32
    %12 = vector.broadcast %cst_12 : f32 to vector<16x1xf32>
    %13 = arith.divf %11, %12 : vector<16x1xf32>
    %14 = vector.broadcast %13 : vector<16x1xf32> to vector<16x32xf32>
    %15 = arith.subf %1, %14 : vector<16x32xf32>
    %16 = arith.mulf %15, %15 : vector<16x32xf32>
    %cst_13 = arith.constant dense<0.000000e+00> : vector<16xf32>
    %17 = vector.multi_reduction <add>, %16, %cst_13 [1] : vector<16x32xf32> to vector<16xf32>
    %18 = vector.shape_cast %17 : vector<16xf32> to vector<16x1xf32>
    %cst_14 = arith.constant 0.0322580636 : f32
    %19 = vector.broadcast %cst_14 : f32 to vector<16x1xf32>
    %20 = arith.mulf %18, %19 : vector<16x1xf32>
    %21 = math.sqrt %20 : vector<16x1xf32>
    %cst_15 = arith.constant 9.99999997E-7 : f32
    %22 = vector.broadcast %cst_15 : f32 to vector<16x1xf32>
    %23 = arith.addf %21, %22 : vector<16x1xf32>
    %24 = tpu.reciprocal %23 {approx = true} : vector<16x1xf32> -> vector<16x1xf32>
    %25 = vector.broadcast %24 : vector<16x1xf32> to vector<16x32xf32>
    %26 = arith.mulf %15, %25 : vector<16x32xf32>
    %27 = vector.broadcast %8 : vector<1x32xf32> to vector<16x32xf32>
    %28 = arith.mulf %27, %26 : vector<16x32xf32>
    %29 = vector.broadcast %9 : vector<1x32xf32> to vector<16x32xf32>
    %30 = arith.addf %28, %29 : vector<16x32xf32>
    %31 = arith.truncf %30 : vector<16x32xf32> to vector<16x32xbf16>
    %c0_16 = arith.constant 0 : index
    %c0_17 = arith.constant 0 : index
    %32 = vector.load %arg3[%c0_16, %c0_17] : memref<32x32xbf16, #tpu.memory_space<vmem>>, vector<32x32xbf16>
    %cst_18 = arith.constant dense<0.000000e+00> : vector<16x32xf32>
    %33 = tpu.matmul %31, %32, %cst_18 {dimension_numbers = #tpu.dot_dimension_numbers<[1], [0], [0], [1], [0, 0, 1, 1], [], []>} : vector<16x32xbf16>, vector<32x32xbf16>, vector<16x32xf32> -> vector<16x32xf32>
    %c0_19 = arith.constant 0 : index
    %c0_20 = arith.constant 0 : index
    %34 = vector.load %arg4[%c0_19, %c0_20] : memref<1x32xf32, #tpu.memory_space<vmem>>, vector<1x32xf32>
    %35 = vector.broadcast %34 : vector<1x32xf32> to vector<16x32xf32>
    %36 = arith.addf %33, %35 : vector<16x32xf32>
    %c0_21 = arith.constant 0 : index
    %c0_22 = arith.constant 0 : index
    %37 = vector.load %arg5[%c0_21, %c0_22] : memref<32x32xbf16, #tpu.memory_space<vmem>>, vector<32x32xbf16>
    %cst_23 = arith.constant dense<0.000000e+00> : vector<16x32xf32>
    %38 = tpu.matmul %31, %37, %cst_23 {dimension_numbers = #tpu.dot_dimension_numbers<[1], [0], [0], [1], [0, 0, 1, 1], [], []>} : vector<16x32xbf16>, vector<32x32xbf16>, vector<16x32xf32> -> vector<16x32xf32>
    %c0_24 = arith.constant 0 : index
    %c0_25 = arith.constant 0 : index
    %39 = vector.load %arg6[%c0_24, %c0_25] : memref<1x32xf32, #tpu.memory_space<vmem>>, vector<1x32xf32>
    %40 = vector.broadcast %39 : vector<1x32xf32> to vector<16x32xf32>
    %41 = arith.addf %38, %40 : vector<16x32xf32>
    %c0_26 = arith.constant 0 : index
    %c0_27 = arith.constant 0 : index
    %42 = vector.load %arg7[%c0_26, %c0_27] : memref<32x32xbf16, #tpu.memory_space<vmem>>, vector<32x32xbf16>
    %cst_28 = arith.constant dense<0.000000e+00> : vector<16x32xf32>
    %43 = tpu.matmul %31, %42, %cst_28 {dimension_numbers = #tpu.dot_dimension_numbers<[1], [0], [0], [1], [0, 0, 1, 1], [], []>} : vector<16x32xbf16>, vector<32x32xbf16>, vector<16x32xf32> -> vector<16x32xf32>
    %c0_29 = arith.constant 0 : index
    %c0_30 = arith.constant 0 : index
    %44 = vector.load %arg8[%c0_29, %c0_30] : memref<1x32xf32, #tpu.memory_space<vmem>>, vector<1x32xf32>
    %45 = vector.broadcast %44 : vector<1x32xf32> to vector<16x32xf32>
    %46 = arith.addf %43, %45 : vector<16x32xf32>
    %cst_31 = arith.constant 0.353553385 : f32
    %47 = vector.broadcast %cst_31 : f32 to vector<16x32xf32>
    %48 = arith.mulf %36, %47 : vector<16x32xf32>
    %49 = vector.extract_strided_slice %48 {offsets = [0, 0], sizes = [8, 32], strides = [1, 1]} : vector<16x32xf32> to vector<8x32xf32>
    %50 = vector.extract_strided_slice %41 {offsets = [0, 0], sizes = [8, 32], strides = [1, 1]} : vector<16x32xf32> to vector<8x32xf32>
    %51 = vector.extract_strided_slice %46 {offsets = [0, 0], sizes = [8, 32], strides = [1, 1]} : vector<16x32xf32> to vector<8x32xf32>
    %52 = vector.extract_strided_slice %49 {offsets = [0, 0], sizes = [8, 8], strides = [1, 1]} : vector<8x32xf32> to vector<8x8xf32>
    %53 = arith.truncf %52 : vector<8x8xf32> to vector<8x8xbf16>
    %c0_32 = arith.constant 0 : index
    %c0_33 = arith.constant 0 : index
    %c0_34 = arith.constant 0 : index
    %54 = vector.load %arg22[%c0_32, %c0_33, %c0_34] : memref<4x8x8xbf16, #tpu.memory_space<vmem>>, vector<1x8x8xbf16>
    %55 = vector.shape_cast %54 : vector<1x8x8xbf16> to vector<8x8xbf16>
    %56 = vector.shape_cast %53 : vector<8x8xbf16> to vector<1x8x8xbf16>
    tpu.vector_store %arg22[%c0_32, %c0_33, %c0_34], %56 {strides = array<i32>} : memref<4x8x8xbf16, #tpu.memory_space<vmem>>, vector<1x8x8xbf16>,
    %57 = vector.extract_strided_slice %50 {offsets = [0, 0], sizes = [8, 8], strides = [1, 1]} : vector<8x32xf32> to vector<8x8xf32>
    %58 = arith.truncf %57 : vector<8x8xf32> to vector<8x8xbf16>
    %c0_35 = arith.constant 0 : index
    %c0_36 = arith.constant 0 : index
    %c0_37 = arith.constant 0 : index
    %59 = vector.load %arg23[%c0_35, %c0_36, %c0_37] : memref<4x8x8xbf16, #tpu.memory_space<vmem>>, vector<1x8x8xbf16>
    %60 = vector.shape_cast %59 : vector<1x8x8xbf16> to vector<8x8xbf16>
    %61 = vector.shape_cast %58 : vector<8x8xbf16> to vector<1x8x8xbf16>
    tpu.vector_store %arg23[%c0_35, %c0_36, %c0_37], %61 {strides = array<i32>} : memref<4x8x8xbf16, #tpu.memory_space<vmem>>, vector<1x8x8xbf16>,
    %62 = vector.extract_strided_slice %51 {offsets = [0, 0], sizes = [8, 8], strides = [1, 1]} : vector<8x32xf32> to vector<8x8xf32>
    %63 = arith.truncf %62 : vector<8x8xf32> to vector<8x8xbf16>
    %c0_38 = arith.constant 0 : index
    %c0_39 = arith.constant 0 : index
    %c0_40 = arith.constant 0 : index
    %64 = vector.load %arg24[%c0_38, %c0_39, %c0_40] : memref<4x8x8xbf16, #tpu.memory_space<vmem>>, vector<1x8x8xbf16>
    %65 = vector.shape_cast %64 : vector<1x8x8xbf16> to vector<8x8xbf16>
    %66 = vector.shape_cast %63 : vector<8x8xbf16> to vector<1x8x8xbf16>
    tpu.vector_store %arg24[%c0_38, %c0_39, %c0_40], %66 {strides = array<i32>} : memref<4x8x8xbf16, #tpu.memory_space<vmem>>, vector<1x8x8xbf16>,
    %67 = vector.extract_strided_slice %49 {offsets = [0, 8], sizes = [8, 8], strides = [1, 1]} : vector<8x32xf32> to vector<8x8xf32>
    %68 = arith.truncf %67 : vector<8x8xf32> to vector<8x8xbf16>
    %c1 = arith.constant 1 : index
    %c0_41 = arith.constant 0 : index
    %c0_42 = arith.constant 0 : index
    %69 = vector.load %arg22[%c1, %c0_41, %c0_42] : memref<4x8x8xbf16, #tpu.memory_space<vmem>>, vector<1x8x8xbf16>
    %70 = vector.shape_cast %69 : vector<1x8x8xbf16> to vector<8x8xbf16>
    %71 = vector.shape_cast %68 : vector<8x8xbf16> to vector<1x8x8xbf16>
    tpu.vector_store %arg22[%c1, %c0_41, %c0_42], %71 {strides = array<i32>} : memref<4x8x8xbf16, #tpu.memory_space<vmem>>, vector<1x8x8xbf16>,
    %72 = vector.extract_strided_slice %50 {offsets = [0, 8], sizes = [8, 8], strides = [1, 1]} : vector<8x32xf32> to vector<8x8xf32>
    %73 = arith.truncf %72 : vector<8x8xf32> to vector<8x8xbf16>
    %c1_43 = arith.constant 1 : index
    %c0_44 = arith.constant 0 : index
    %c0_45 = arith.constant 0 : index
    %74 = vector.load %arg23[%c1_43, %c0_44, %c0_45] : memref<4x8x8xbf16, #tpu.memory_space<vmem>>, vector<1x8x8xbf16>
    %75 = vector.shape_cast %74 : vector<1x8x8xbf16> to vector<8x8xbf16>
    %76 = vector.shape_cast %73 : vector<8x8xbf16> to vector<1x8x8xbf16>
    tpu.vector_store %arg23[%c1_43, %c0_44, %c0_45], %76 {strides = array<i32>} : memref<4x8x8xbf16, #tpu.memory_space<vmem>>, vector<1x8x8xbf16>,
    %77 = vector.extract_strided_slice %51 {offsets = [0, 8], sizes = [8, 8], strides = [1, 1]} : vector<8x32xf32> to vector<8x8xf32>
    %78 = arith.truncf %77 : vector<8x8xf32> to vector<8x8xbf16>
    %c1_46 = arith.constant 1 : index
    %c0_47 = arith.constant 0 : index
    %c0_48 = arith.constant 0 : index
    %79 = vector.load %arg24[%c1_46, %c0_47, %c0_48] : memref<4x8x8xbf16, #tpu.memory_space<vmem>>, vector<1x8x8xbf16>
    %80 = vector.shape_cast %79 : vector<1x8x8xbf16> to vector<8x8xbf16>
    %81 = vector.shape_cast %78 : vector<8x8xbf16> to vector<1x8x8xbf16>
    tpu.vector_store %arg24[%c1_46, %c0_47, %c0_48], %81 {strides = array<i32>} : memref<4x8x8xbf16, #tpu.memory_space<vmem>>, vector<1x8x8xbf16>,
    %82 = vector.extract_strided_slice %49 {offsets = [0, 16], sizes = [8, 8], strides = [1, 1]} : vector<8x32xf32> to vector<8x8xf32>
    %83 = arith.truncf %82 : vector<8x8xf32> to vector<8x8xbf16>
    %c2 = arith.constant 2 : index
    %c0_49 = arith.constant 0 : index
    %c0_50 = arith.constant 0 : index
    %84 = vector.load %arg22[%c2, %c0_49, %c0_50] : memref<4x8x8xbf16, #tpu.memory_space<vmem>>, vector<1x8x8xbf16>
    %85 = vector.shape_cast %84 : vector<1x8x8xbf16> to vector<8x8xbf16>
    %86 = vector.shape_cast %83 : vector<8x8xbf16> to vector<1x8x8xbf16>
    tpu.vector_store %arg22[%c2, %c0_49, %c0_50], %86 {strides = array<i32>} : memref<4x8x8xbf16, #tpu.memory_space<vmem>>, vector<1x8x8xbf16>,
    %87 = vector.extract_strided_slice %50 {offsets = [0, 16], sizes = [8, 8], strides = [1, 1]} : vector<8x32xf32> to vector<8x8xf32>
    %88 = arith.truncf %87 : vector<8x8xf32> to vector<8x8xbf16>
    %c2_51 = arith.constant 2 : index
    %c0_52 = arith.constant 0 : index
    %c0_53 = arith.constant 0 : index
    %89 = vector.load %arg23[%c2_51, %c0_52, %c0_53] : memref<4x8x8xbf16, #tpu.memory_space<vmem>>, vector<1x8x8xbf16>
    %90 = vector.shape_cast %89 : vector<1x8x8xbf16> to vector<8x8xbf16>
    %91 = vector.shape_cast %88 : vector<8x8xbf16> to vector<1x8x8xbf16>
    tpu.vector_store %arg23[%c2_51, %c0_52, %c0_53], %91 {strides = array<i32>} : memref<4x8x8xbf16, #tpu.memory_space<vmem>>, vector<1x8x8xbf16>,
    %92 = vector.extract_strided_slice %51 {offsets = [0, 16], sizes = [8, 8], strides = [1, 1]} : vector<8x32xf32> to vector<8x8xf32>
    %93 = arith.truncf %92 : vector<8x8xf32> to vector<8x8xbf16>
    %c2_54 = arith.constant 2 : index
    %c0_55 = arith.constant 0 : index
    %c0_56 = arith.constant 0 : index
    %94 = vector.load %arg24[%c2_54, %c0_55, %c0_56] : memref<4x8x8xbf16, #tpu.memory_space<vmem>>, vector<1x8x8xbf16>
    %95 = vector.shape_cast %94 : vector<1x8x8xbf16> to vector<8x8xbf16>
    %96 = vector.shape_cast %93 : vector<8x8xbf16> to vector<1x8x8xbf16>
    tpu.vector_store %arg24[%c2_54, %c0_55, %c0_56], %96 {strides = array<i32>} : memref<4x8x8xbf16, #tpu.memory_space<vmem>>, vector<1x8x8xbf16>,
    %97 = vector.extract_strided_slice %49 {offsets = [0, 24], sizes = [8, 8], strides = [1, 1]} : vector<8x32xf32> to vector<8x8xf32>
    %98 = arith.truncf %97 : vector<8x8xf32> to vector<8x8xbf16>
    %c3 = arith.constant 3 : index
    %c0_57 = arith.constant 0 : index
    %c0_58 = arith.constant 0 : index
    %99 = vector.load %arg22[%c3, %c0_57, %c0_58] : memref<4x8x8xbf16, #tpu.memory_space<vmem>>, vector<1x8x8xbf16>
    %100 = vector.shape_cast %99 : vector<1x8x8xbf16> to vector<8x8xbf16>
    %101 = vector.shape_cast %98 : vector<8x8xbf16> to vector<1x8x8xbf16>
    tpu.vector_store %arg22[%c3, %c0_57, %c0_58], %101 {strides = array<i32>} : memref<4x8x8xbf16, #tpu.memory_space<vmem>>, vector<1x8x8xbf16>,
    %102 = vector.extract_strided_slice %50 {offsets = [0, 24], sizes = [8, 8], strides = [1, 1]} : vector<8x32xf32> to vector<8x8xf32>
    %103 = arith.truncf %102 : vector<8x8xf32> to vector<8x8xbf16>
    %c3_59 = arith.constant 3 : index
    %c0_60 = arith.constant 0 : index
    %c0_61 = arith.constant 0 : index
    %104 = vector.load %arg23[%c3_59, %c0_60, %c0_61] : memref<4x8x8xbf16, #tpu.memory_space<vmem>>, vector<1x8x8xbf16>
    %105 = vector.shape_cast %104 : vector<1x8x8xbf16> to vector<8x8xbf16>
    %106 = vector.shape_cast %103 : vector<8x8xbf16> to vector<1x8x8xbf16>
    tpu.vector_store %arg23[%c3_59, %c0_60, %c0_61], %106 {strides = array<i32>} : memref<4x8x8xbf16, #tpu.memory_space<vmem>>, vector<1x8x8xbf16>,
    %107 = vector.extract_strided_slice %51 {offsets = [0, 24], sizes = [8, 8], strides = [1, 1]} : vector<8x32xf32> to vector<8x8xf32>
    %108 = arith.truncf %107 : vector<8x8xf32> to vector<8x8xbf16>
    %c3_62 = arith.constant 3 : index
    %c0_63 = arith.constant 0 : index
    %c0_64 = arith.constant 0 : index
    %109 = vector.load %arg24[%c3_62, %c0_63, %c0_64] : memref<4x8x8xbf16, #tpu.memory_space<vmem>>, vector<1x8x8xbf16>
    %110 = vector.shape_cast %109 : vector<1x8x8xbf16> to vector<8x8xbf16>
    %111 = vector.shape_cast %108 : vector<8x8xbf16> to vector<1x8x8xbf16>
    tpu.vector_store %arg24[%c3_62, %c0_63, %c0_64], %111 {strides = array<i32>} : memref<4x8x8xbf16, #tpu.memory_space<vmem>>, vector<1x8x8xbf16>,
    %c0_65 = arith.constant 0 : index
    %c0_66 = arith.constant 0 : index
    %c0_67 = arith.constant 0 : index
    %112 = vector.load %arg22[%c0_65, %c0_66, %c0_67] : memref<4x8x8xbf16, #tpu.memory_space<vmem>>, vector<4x8x8xbf16>
    %c0_68 = arith.constant 0 : index
    %c0_69 = arith.constant 0 : index
    %c0_70 = arith.constant 0 : index
    %113 = vector.load %arg23[%c0_68, %c0_69, %c0_70] : memref<4x8x8xbf16, #tpu.memory_space<vmem>>, vector<4x8x8xbf16>
    %c0_71 = arith.constant 0 : index
    %c0_72 = arith.constant 0 : index
    %c0_73 = arith.constant 0 : index
    %114 = vector.load %arg24[%c0_71, %c0_72, %c0_73] : memref<4x8x8xbf16, #tpu.memory_space<vmem>>, vector<4x8x8xbf16>
    "tpu.trace_start"() <{level = 10 : i32, message = "hqd,hkd->hqk"}> : () -> ()
    %cst_74 = arith.constant dense<0.000000e+00> : vector<4x8x8xf32>
    %115 = tpu.matmul %112, %113, %cst_74 {dimension_numbers = #tpu.dot_dimension_numbers<[2], [2], [1], [1], [0, 0, 0, 1, 1, 1], [0], [0]>} : vector<4x8x8xbf16>, vector<4x8x8xbf16>, vector<4x8x8xf32> -> vector<4x8x8xf32>
    "tpu.trace_stop"() : () -> ()
    %116 = vector.extract_strided_slice %7 {offsets = [0, 0, 0], sizes = [1, 1, 8], strides = [1, 1, 1]} : vector<2x1x8xf32> to vector<1x1x8xf32>
    %117 = vector.shape_cast %116 : vector<1x1x8xf32> to vector<1x8xf32>
    %118 = vector.shape_cast %117 : vector<1x8xf32> to vector<1x1x8xf32>
    %119 = vector.broadcast %118 : vector<1x1x8xf32> to vector<4x8x8xf32>
    %120 = arith.addf %115, %119 : vector<4x8x8xf32>
    %cst_75 = arith.constant dense<0xFF800000> : vector<4x8xf32>
    %121 = vector.multi_reduction <maximumf>, %120, %cst_75 [2] : vector<4x8x8xf32> to vector<4x8xf32>
    %122 = vector.shape_cast %121 : vector<4x8xf32> to vector<4x8x1xf32>
    %123 = vector.broadcast %122 : vector<4x8x1xf32> to vector<4x8x8xf32>
    %124 = arith.subf %120, %123 : vector<4x8x8xf32>
    %125 = math.exp %124 : vector<4x8x8xf32>
    %cst_76 = arith.constant dense<0.000000e+00> : vector<4x8xf32>
    %126 = vector.multi_reduction <add>, %125, %cst_76 [2] : vector<4x8x8xf32> to vector<4x8xf32>
    %127 = vector.shape_cast %126 : vector<4x8xf32> to vector<4x8x1xf32>
    %128 = tpu.reciprocal %127 {approx = true} : vector<4x8x1xf32> -> vector<4x8x1xf32>
    %129 = vector.broadcast %128 : vector<4x8x1xf32> to vector<4x8x8xf32>
    %130 = arith.mulf %125, %129 : vector<4x8x8xf32>
    %131 = arith.truncf %130 : vector<4x8x8xf32> to vector<4x8x8xbf16>
    "tpu.trace_start"() <{level = 10 : i32, message = "hqk,hkd->hqd"}> : () -> ()
    %cst_77 = arith.constant dense<0.000000e+00> : vector<4x8x8xf32>
    %132 = tpu.matmul %131, %114, %cst_77 {dimension_numbers = #tpu.dot_dimension_numbers<[2], [1], [1], [2], [0, 0, 0, 1, 1, 2], [0], [0]>} : vector<4x8x8xbf16>, vector<4x8x8xbf16>, vector<4x8x8xf32> -> vector<4x8x8xf32>
    "tpu.trace_stop"() : () -> ()
    %133 = vector.extract_strided_slice %132 {offsets = [0, 0, 0], sizes = [1, 8, 8], strides = [1, 1, 1]} : vector<4x8x8xf32> to vector<1x8x8xf32>
    %134 = vector.shape_cast %133 : vector<1x8x8xf32> to vector<8x8xf32>
    %135 = arith.truncf %134 : vector<8x8xf32> to vector<8x8xbf16>
    %c0_78 = arith.constant 0 : index
    %c0_79 = arith.constant 0 : index
    %136 = vector.load %arg25[%c0_78, %c0_79] : memref<16x32xbf16, #tpu.memory_space<vmem>>, vector<8x8xbf16>
    tpu.vector_store %arg25[%c0_78, %c0_79], %135 {strides = array<i32>} : memref<16x32xbf16, #tpu.memory_space<vmem>>, vector<8x8xbf16>,
    %137 = vector.extract_strided_slice %132 {offsets = [1, 0, 0], sizes = [1, 8, 8], strides = [1, 1, 1]} : vector<4x8x8xf32> to vector<1x8x8xf32>
    %138 = vector.shape_cast %137 : vector<1x8x8xf32> to vector<8x8xf32>
    %139 = arith.truncf %138 : vector<8x8xf32> to vector<8x8xbf16>
    %c0_80 = arith.constant 0 : index
    %c8 = arith.constant 8 : index
    %140 = vector.load %arg25[%c0_80, %c8] : memref<16x32xbf16, #tpu.memory_space<vmem>>, vector<8x8xbf16>
    tpu.vector_store %arg25[%c0_80, %c8], %139 {strides = array<i32>} : memref<16x32xbf16, #tpu.memory_space<vmem>>, vector<8x8xbf16>,
    %141 = vector.extract_strided_slice %132 {offsets = [2, 0, 0], sizes = [1, 8, 8], strides = [1, 1, 1]} : vector<4x8x8xf32> to vector<1x8x8xf32>
    %142 = vector.shape_cast %141 : vector<1x8x8xf32> to vector<8x8xf32>
    %143 = arith.truncf %142 : vector<8x8xf32> to vector<8x8xbf16>
    %c0_81 = arith.constant 0 : index
    %c16 = arith.constant 16 : index
    %144 = vector.load %arg25[%c0_81, %c16] : memref<16x32xbf16, #tpu.memory_space<vmem>>, vector<8x8xbf16>
    tpu.vector_store %arg25[%c0_81, %c16], %143 {strides = array<i32>} : memref<16x32xbf16, #tpu.memory_space<vmem>>, vector<8x8xbf16>,
    %145 = vector.extract_strided_slice %132 {offsets = [3, 0, 0], sizes = [1, 8, 8], strides = [1, 1, 1]} : vector<4x8x8xf32> to vector<1x8x8xf32>
    %146 = vector.shape_cast %145 : vector<1x8x8xf32> to vector<8x8xf32>
    %147 = arith.truncf %146 : vector<8x8xf32> to vector<8x8xbf16>
    %c0_82 = arith.constant 0 : index
    %c24 = arith.constant 24 : index
    %148 = vector.load %arg25[%c0_82, %c24] : memref<16x32xbf16, #tpu.memory_space<vmem>>, vector<8x8xbf16>
    tpu.vector_store %arg25[%c0_82, %c24], %147 {strides = array<i32>} : memref<16x32xbf16, #tpu.memory_space<vmem>>, vector<8x8xbf16>,
    %149 = vector.extract_strided_slice %48 {offsets = [8, 0], sizes = [8, 32], strides = [1, 1]} : vector<16x32xf32> to vector<8x32xf32>
    %150 = vector.extract_strided_slice %41 {offsets = [8, 0], sizes = [8, 32], strides = [1, 1]} : vector<16x32xf32> to vector<8x32xf32>
    %151 = vector.extract_strided_slice %46 {offsets = [8, 0], sizes = [8, 32], strides = [1, 1]} : vector<16x32xf32> to vector<8x32xf32>
    %152 = vector.extract_strided_slice %149 {offsets = [0, 0], sizes = [8, 8], strides = [1, 1]} : vector<8x32xf32> to vector<8x8xf32>
    %153 = arith.truncf %152 : vector<8x8xf32> to vector<8x8xbf16>
    %c0_83 = arith.constant 0 : index
    %c0_84 = arith.constant 0 : index
    %c0_85 = arith.constant 0 : index
    %154 = vector.load %arg22[%c0_83, %c0_84, %c0_85] : memref<4x8x8xbf16, #tpu.memory_space<vmem>>, vector<1x8x8xbf16>
    %155 = vector.shape_cast %154 : vector<1x8x8xbf16> to vector<8x8xbf16>
    %156 = vector.shape_cast %153 : vector<8x8xbf16> to vector<1x8x8xbf16>
    tpu.vector_store %arg22[%c0_83, %c0_84, %c0_85], %156 {strides = array<i32>} : memref<4x8x8xbf16, #tpu.memory_space<vmem>>, vector<1x8x8xbf16>,
    %157 = vector.extract_strided_slice %150 {offsets = [0, 0], sizes = [8, 8], strides = [1, 1]} : vector<8x32xf32> to vector<8x8xf32>
    %158 = arith.truncf %157 : vector<8x8xf32> to vector<8x8xbf16>
    %c0_86 = arith.constant 0 : index
    %c0_87 = arith.constant 0 : index
    %c0_88 = arith.constant 0 : index
    %159 = vector.load %arg23[%c0_86, %c0_87, %c0_88] : memref<4x8x8xbf16, #tpu.memory_space<vmem>>, vector<1x8x8xbf16>
    %160 = vector.shape_cast %159 : vector<1x8x8xbf16> to vector<8x8xbf16>
    %161 = vector.shape_cast %158 : vector<8x8xbf16> to vector<1x8x8xbf16>
    tpu.vector_store %arg23[%c0_86, %c0_87, %c0_88], %161 {strides = array<i32>} : memref<4x8x8xbf16, #tpu.memory_space<vmem>>, vector<1x8x8xbf16>,
    %162 = vector.extract_strided_slice %151 {offsets = [0, 0], sizes = [8, 8], strides = [1, 1]} : vector<8x32xf32> to vector<8x8xf32>
    %163 = arith.truncf %162 : vector<8x8xf32> to vector<8x8xbf16>
    %c0_89 = arith.constant 0 : index
    %c0_90 = arith.constant 0 : index
    %c0_91 = arith.constant 0 : index
    %164 = vector.load %arg24[%c0_89, %c0_90, %c0_91] : memref<4x8x8xbf16, #tpu.memory_space<vmem>>, vector<1x8x8xbf16>
    %165 = vector.shape_cast %164 : vector<1x8x8xbf16> to vector<8x8xbf16>
    %166 = vector.shape_cast %163 : vector<8x8xbf16> to vector<1x8x8xbf16>
    tpu.vector_store %arg24[%c0_89, %c0_90, %c0_91], %166 {strides = array<i32>} : memref<4x8x8xbf16, #tpu.memory_space<vmem>>, vector<1x8x8xbf16>,
    %167 = vector.extract_strided_slice %149 {offsets = [0, 8], sizes = [8, 8], strides = [1, 1]} : vector<8x32xf32> to vector<8x8xf32>
    %168 = arith.truncf %167 : vector<8x8xf32> to vector<8x8xbf16>
    %c1_92 = arith.constant 1 : index
    %c0_93 = arith.constant 0 : index
    %c0_94 = arith.constant 0 : index
    %169 = vector.load %arg22[%c1_92, %c0_93, %c0_94] : memref<4x8x8xbf16, #tpu.memory_space<vmem>>, vector<1x8x8xbf16>
    %170 = vector.shape_cast %169 : vector<1x8x8xbf16> to vector<8x8xbf16>
    %171 = vector.shape_cast %168 : vector<8x8xbf16> to vector<1x8x8xbf16>
    tpu.vector_store %arg22[%c1_92, %c0_93, %c0_94], %171 {strides = array<i32>} : memref<4x8x8xbf16, #tpu.memory_space<vmem>>, vector<1x8x8xbf16>,
    %172 = vector.extract_strided_slice %150 {offsets = [0, 8], sizes = [8, 8], strides = [1, 1]} : vector<8x32xf32> to vector<8x8xf32>
    %173 = arith.truncf %172 : vector<8x8xf32> to vector<8x8xbf16>
    %c1_95 = arith.constant 1 : index
    %c0_96 = arith.constant 0 : index
    %c0_97 = arith.constant 0 : index
    %174 = vector.load %arg23[%c1_95, %c0_96, %c0_97] : memref<4x8x8xbf16, #tpu.memory_space<vmem>>, vector<1x8x8xbf16>
    %175 = vector.shape_cast %174 : vector<1x8x8xbf16> to vector<8x8xbf16>
    %176 = vector.shape_cast %173 : vector<8x8xbf16> to vector<1x8x8xbf16>
    tpu.vector_store %arg23[%c1_95, %c0_96, %c0_97], %176 {strides = array<i32>} : memref<4x8x8xbf16, #tpu.memory_space<vmem>>, vector<1x8x8xbf16>,
    %177 = vector.extract_strided_slice %151 {offsets = [0, 8], sizes = [8, 8], strides = [1, 1]} : vector<8x32xf32> to vector<8x8xf32>
    %178 = arith.truncf %177 : vector<8x8xf32> to vector<8x8xbf16>
    %c1_98 = arith.constant 1 : index
    %c0_99 = arith.constant 0 : index
    %c0_100 = arith.constant 0 : index
    %179 = vector.load %arg24[%c1_98, %c0_99, %c0_100] : memref<4x8x8xbf16, #tpu.memory_space<vmem>>, vector<1x8x8xbf16>
    %180 = vector.shape_cast %179 : vector<1x8x8xbf16> to vector<8x8xbf16>
    %181 = vector.shape_cast %178 : vector<8x8xbf16> to vector<1x8x8xbf16>
    tpu.vector_store %arg24[%c1_98, %c0_99, %c0_100], %181 {strides = array<i32>} : memref<4x8x8xbf16, #tpu.memory_space<vmem>>, vector<1x8x8xbf16>,
    %182 = vector.extract_strided_slice %149 {offsets = [0, 16], sizes = [8, 8], strides = [1, 1]} : vector<8x32xf32> to vector<8x8xf32>
    %183 = arith.truncf %182 : vector<8x8xf32> to vector<8x8xbf16>
    %c2_101 = arith.constant 2 : index
    %c0_102 = arith.constant 0 : index
    %c0_103 = arith.constant 0 : index
    %184 = vector.load %arg22[%c2_101, %c0_102, %c0_103] : memref<4x8x8xbf16, #tpu.memory_space<vmem>>, vector<1x8x8xbf16>
    %185 = vector.shape_cast %184 : vector<1x8x8xbf16> to vector<8x8xbf16>
    %186 = vector.shape_cast %183 : vector<8x8xbf16> to vector<1x8x8xbf16>
    tpu.vector_store %arg22[%c2_101, %c0_102, %c0_103], %186 {strides = array<i32>} : memref<4x8x8xbf16, #tpu.memory_space<vmem>>, vector<1x8x8xbf16>,
    %187 = vector.extract_strided_slice %150 {offsets = [0, 16], sizes = [8, 8], strides = [1, 1]} : vector<8x32xf32> to vector<8x8xf32>
    %188 = arith.truncf %187 : vector<8x8xf32> to vector<8x8xbf16>
    %c2_104 = arith.constant 2 : index
    %c0_105 = arith.constant 0 : index
    %c0_106 = arith.constant 0 : index
    %189 = vector.load %arg23[%c2_104, %c0_105, %c0_106] : memref<4x8x8xbf16, #tpu.memory_space<vmem>>, vector<1x8x8xbf16>
    %190 = vector.shape_cast %189 : vector<1x8x8xbf16> to vector<8x8xbf16>
    %191 = vector.shape_cast %188 : vector<8x8xbf16> to vector<1x8x8xbf16>
    tpu.vector_store %arg23[%c2_104, %c0_105, %c0_106], %191 {strides = array<i32>} : memref<4x8x8xbf16, #tpu.memory_space<vmem>>, vector<1x8x8xbf16>,
    %192 = vector.extract_strided_slice %151 {offsets = [0, 16], sizes = [8, 8], strides = [1, 1]} : vector<8x32xf32> to vector<8x8xf32>
    %193 = arith.truncf %192 : vector<8x8xf32> to vector<8x8xbf16>
    %c2_107 = arith.constant 2 : index
    %c0_108 = arith.constant 0 : index
    %c0_109 = arith.constant 0 : index
    %194 = vector.load %arg24[%c2_107, %c0_108, %c0_109] : memref<4x8x8xbf16, #tpu.memory_space<vmem>>, vector<1x8x8xbf16>
    %195 = vector.shape_cast %194 : vector<1x8x8xbf16> to vector<8x8xbf16>
    %196 = vector.shape_cast %193 : vector<8x8xbf16> to vector<1x8x8xbf16>
    tpu.vector_store %arg24[%c2_107, %c0_108, %c0_109], %196 {strides = array<i32>} : memref<4x8x8xbf16, #tpu.memory_space<vmem>>, vector<1x8x8xbf16>,
    %197 = vector.extract_strided_slice %149 {offsets = [0, 24], sizes = [8, 8], strides = [1, 1]} : vector<8x32xf32> to vector<8x8xf32>
    %198 = arith.truncf %197 : vector<8x8xf32> to vector<8x8xbf16>
    %c3_110 = arith.constant 3 : index
    %c0_111 = arith.constant 0 : index
    %c0_112 = arith.constant 0 : index
    %199 = vector.load %arg22[%c3_110, %c0_111, %c0_112] : memref<4x8x8xbf16, #tpu.memory_space<vmem>>, vector<1x8x8xbf16>
    %200 = vector.shape_cast %199 : vector<1x8x8xbf16> to vector<8x8xbf16>
    %201 = vector.shape_cast %198 : vector<8x8xbf16> to vector<1x8x8xbf16>
    tpu.vector_store %arg22[%c3_110, %c0_111, %c0_112], %201 {strides = array<i32>} : memref<4x8x8xbf16, #tpu.memory_space<vmem>>, vector<1x8x8xbf16>,
    %202 = vector.extract_strided_slice %150 {offsets = [0, 24], sizes = [8, 8], strides = [1, 1]} : vector<8x32xf32> to vector<8x8xf32>
    %203 = arith.truncf %202 : vector<8x8xf32> to vector<8x8xbf16>
    %c3_113 = arith.constant 3 : index
    %c0_114 = arith.constant 0 : index
    %c0_115 = arith.constant 0 : index
    %204 = vector.load %arg23[%c3_113, %c0_114, %c0_115] : memref<4x8x8xbf16, #tpu.memory_space<vmem>>, vector<1x8x8xbf16>
    %205 = vector.shape_cast %204 : vector<1x8x8xbf16> to vector<8x8xbf16>
    %206 = vector.shape_cast %203 : vector<8x8xbf16> to vector<1x8x8xbf16>
    tpu.vector_store %arg23[%c3_113, %c0_114, %c0_115], %206 {strides = array<i32>} : memref<4x8x8xbf16, #tpu.memory_space<vmem>>, vector<1x8x8xbf16>,
    %207 = vector.extract_strided_slice %151 {offsets = [0, 24], sizes = [8, 8], strides = [1, 1]} : vector<8x32xf32> to vector<8x8xf32>
    %208 = arith.truncf %207 : vector<8x8xf32> to vector<8x8xbf16>
    %c3_116 = arith.constant 3 : index
    %c0_117 = arith.constant 0 : index
    %c0_118 = arith.constant 0 : index
    %209 = vector.load %arg24[%c3_116, %c0_117, %c0_118] : memref<4x8x8xbf16, #tpu.memory_space<vmem>>, vector<1x8x8xbf16>
    %210 = vector.shape_cast %209 : vector<1x8x8xbf16> to vector<8x8xbf16>
    %211 = vector.shape_cast %208 : vector<8x8xbf16> to vector<1x8x8xbf16>
    tpu.vector_store %arg24[%c3_116, %c0_117, %c0_118], %211 {strides = array<i32>} : memref<4x8x8xbf16, #tpu.memory_space<vmem>>, vector<1x8x8xbf16>,
    %c0_119 = arith.constant 0 : index
    %c0_120 = arith.constant 0 : index
    %c0_121 = arith.constant 0 : index
    %212 = vector.load %arg22[%c0_119, %c0_120, %c0_121] : memref<4x8x8xbf16, #tpu.memory_space<vmem>>, vector<4x8x8xbf16>
    %c0_122 = arith.constant 0 : index
    %c0_123 = arith.constant 0 : index
    %c0_124 = arith.constant 0 : index
    %213 = vector.load %arg23[%c0_122, %c0_123, %c0_124] : memref<4x8x8xbf16, #tpu.memory_space<vmem>>, vector<4x8x8xbf16>
    %c0_125 = arith.constant 0 : index
    %c0_126 = arith.constant 0 : index
    %c0_127 = arith.constant 0 : index
    %214 = vector.load %arg24[%c0_125, %c0_126, %c0_127] : memref<4x8x8xbf16, #tpu.memory_space<vmem>>, vector<4x8x8xbf16>
    "tpu.trace_start"() <{level = 10 : i32, message = "hqd,hkd->hqk"}> : () -> ()
    %cst_128 = arith.constant dense<0.000000e+00> : vector<4x8x8xf32>
    %215 = tpu.matmul %212, %213, %cst_128 {dimension_numbers = #tpu.dot_dimension_numbers<[2], [2], [1], [1], [0, 0, 0, 1, 1, 1], [0], [0]>} : vector<4x8x8xbf16>, vector<4x8x8xbf16>, vector<4x8x8xf32> -> vector<4x8x8xf32>
    "tpu.trace_stop"() : () -> ()
    %216 = vector.extract_strided_slice %7 {offsets = [1, 0, 0], sizes = [1, 1, 8], strides = [1, 1, 1]} : vector<2x1x8xf32> to vector<1x1x8xf32>
    %217 = vector.shape_cast %216 : vector<1x1x8xf32> to vector<1x8xf32>
    %218 = vector.shape_cast %217 : vector<1x8xf32> to vector<1x1x8xf32>
    %219 = vector.broadcast %218 : vector<1x1x8xf32> to vector<4x8x8xf32>
    %220 = arith.addf %215, %219 : vector<4x8x8xf32>
    %cst_129 = arith.constant dense<0xFF800000> : vector<4x8xf32>
    %221 = vector.multi_reduction <maximumf>, %220, %cst_129 [2] : vector<4x8x8xf32> to vector<4x8xf32>
    %222 = vector.shape_cast %221 : vector<4x8xf32> to vector<4x8x1xf32>
    %223 = vector.broadcast %222 : vector<4x8x1xf32> to vector<4x8x8xf32>
    %224 = arith.subf %220, %223 : vector<4x8x8xf32>
    %225 = math.exp %224 : vector<4x8x8xf32>
    %cst_130 = arith.constant dense<0.000000e+00> : vector<4x8xf32>
    %226 = vector.multi_reduction <add>, %225, %cst_130 [2] : vector<4x8x8xf32> to vector<4x8xf32>
    %227 = vector.shape_cast %226 : vector<4x8xf32> to vector<4x8x1xf32>
    %228 = tpu.reciprocal %227 {approx = true} : vector<4x8x1xf32> -> vector<4x8x1xf32>
    %229 = vector.broadcast %228 : vector<4x8x1xf32> to vector<4x8x8xf32>
    %230 = arith.mulf %225, %229 : vector<4x8x8xf32>
    %231 = arith.truncf %230 : vector<4x8x8xf32> to vector<4x8x8xbf16>
    "tpu.trace_start"() <{level = 10 : i32, message = "hqk,hkd->hqd"}> : () -> ()
    %cst_131 = arith.constant dense<0.000000e+00> : vector<4x8x8xf32>
    %232 = tpu.matmul %231, %214, %cst_131 {dimension_numbers = #tpu.dot_dimension_numbers<[2], [1], [1], [2], [0, 0, 0, 1, 1, 2], [0], [0]>} : vector<4x8x8xbf16>, vector<4x8x8xbf16>, vector<4x8x8xf32> -> vector<4x8x8xf32>
    "tpu.trace_stop"() : () -> ()
    %233 = vector.extract_strided_slice %232 {offsets = [0, 0, 0], sizes = [1, 8, 8], strides = [1, 1, 1]} : vector<4x8x8xf32> to vector<1x8x8xf32>
    %234 = vector.shape_cast %233 : vector<1x8x8xf32> to vector<8x8xf32>
    %235 = arith.truncf %234 : vector<8x8xf32> to vector<8x8xbf16>
    %c8_132 = arith.constant 8 : index
    %c0_133 = arith.constant 0 : index
    %236 = vector.load %arg25[%c8_132, %c0_133] : memref<16x32xbf16, #tpu.memory_space<vmem>>, vector<8x8xbf16>
    tpu.vector_store %arg25[%c8_132, %c0_133], %235 {strides = array<i32>} : memref<16x32xbf16, #tpu.memory_space<vmem>>, vector<8x8xbf16>,
    %237 = vector.extract_strided_slice %232 {offsets = [1, 0, 0], sizes = [1, 8, 8], strides = [1, 1, 1]} : vector<4x8x8xf32> to vector<1x8x8xf32>
    %238 = vector.shape_cast %237 : vector<1x8x8xf32> to vector<8x8xf32>
    %239 = arith.truncf %238 : vector<8x8xf32> to vector<8x8xbf16>
    %c8_134 = arith.constant 8 : index
    %c8_135 = arith.constant 8 : index
    %240 = vector.load %arg25[%c8_134, %c8_135] : memref<16x32xbf16, #tpu.memory_space<vmem>>, vector<8x8xbf16>
    tpu.vector_store %arg25[%c8_134, %c8_135], %239 {strides = array<i32>} : memref<16x32xbf16, #tpu.memory_space<vmem>>, vector<8x8xbf16>,
    %241 = vector.extract_strided_slice %232 {offsets = [2, 0, 0], sizes = [1, 8, 8], strides = [1, 1, 1]} : vector<4x8x8xf32> to vector<1x8x8xf32>
    %242 = vector.shape_cast %241 : vector<1x8x8xf32> to vector<8x8xf32>
    %243 = arith.truncf %242 : vector<8x8xf32> to vector<8x8xbf16>
    %c8_136 = arith.constant 8 : index
    %c16_137 = arith.constant 16 : index
    %244 = vector.load %arg25[%c8_136, %c16_137] : memref<16x32xbf16, #tpu.memory_space<vmem>>, vector<8x8xbf16>
    tpu.vector_store %arg25[%c8_136, %c16_137], %243 {strides = array<i32>} : memref<16x32xbf16, #tpu.memory_space<vmem>>, vector<8x8xbf16>,
    %245 = vector.extract_strided_slice %232 {offsets = [3, 0, 0], sizes = [1, 8, 8], strides = [1, 1, 1]} : vector<4x8x8xf32> to vector<1x8x8xf32>
    %246 = vector.shape_cast %245 : vector<1x8x8xf32> to vector<8x8xf32>
    %247 = arith.truncf %246 : vector<8x8xf32> to vector<8x8xbf16>
    %c8_138 = arith.constant 8 : index
    %c24_139 = arith.constant 24 : index
    %248 = vector.load %arg25[%c8_138, %c24_139] : memref<16x32xbf16, #tpu.memory_space<vmem>>, vector<8x8xbf16>
    tpu.vector_store %arg25[%c8_138, %c24_139], %247 {strides = array<i32>} : memref<16x32xbf16, #tpu.memory_space<vmem>>, vector<8x8xbf16>,
    %c0_140 = arith.constant 0 : index
    %c0_141 = arith.constant 0 : index
    %249 = vector.load %arg25[%c0_140, %c0_141] : memref<16x32xbf16, #tpu.memory_space<vmem>>, vector<16x32xbf16>
    %c0_142 = arith.constant 0 : index
    %c0_143 = arith.constant 0 : index
    %250 = vector.load %arg9[%c0_142, %c0_143] : memref<32x32xbf16, #tpu.memory_space<vmem>>, vector<32x32xbf16>
    %cst_144 = arith.constant dense<0.000000e+00> : vector<16x32xf32>
    %251 = tpu.matmul %249, %250, %cst_144 {dimension_numbers = #tpu.dot_dimension_numbers<[1], [0], [0], [1], [0, 0, 1, 1], [], []>} : vector<16x32xbf16>, vector<32x32xbf16>, vector<16x32xf32> -> vector<16x32xf32>
    %c0_145 = arith.constant 0 : index
    %c0_146 = arith.constant 0 : index
    %252 = vector.load %arg10[%c0_145, %c0_146] : memref<1x32xf32, #tpu.memory_space<vmem>>, vector<1x32xf32>
    %253 = vector.broadcast %252 : vector<1x32xf32> to vector<16x32xf32>
    %254 = arith.addf %251, %253 : vector<16x32xf32>
    %255 = arith.addf %1, %254 : vector<16x32xf32>
    %c0_147 = arith.constant 0 : index
    %c0_148 = arith.constant 0 : index
    %256 = vector.load %arg17[%c0_147, %c0_148] : memref<1x32xf32, #tpu.memory_space<vmem>>, vector<1x32xf32>
    %c0_149 = arith.constant 0 : index
    %c0_150 = arith.constant 0 : index
    %257 = vector.load %arg18[%c0_149, %c0_150] : memref<1x32xf32, #tpu.memory_space<vmem>>, vector<1x32xf32>
    %cst_151 = arith.constant dense<0.000000e+00> : vector<16xf32>
    %258 = vector.multi_reduction <add>, %255, %cst_151 [1] : vector<16x32xf32> to vector<16xf32>
    %259 = vector.shape_cast %258 : vector<16xf32> to vector<16x1xf32>
    %cst_152 = arith.constant 3.200000e+01 : f32
    %260 = vector.broadcast %cst_152 : f32 to vector<16x1xf32>
    %261 = arith.divf %259, %260 : vector<16x1xf32>
    %262 = vector.broadcast %261 : vector<16x1xf32> to vector<16x32xf32>
    %263 = arith.subf %255, %262 : vector<16x32xf32>
    %264 = arith.mulf %263, %263 : vector<16x32xf32>
    %cst_153 = arith.constant dense<0.000000e+00> : vector<16xf32>
    %265 = vector.multi_reduction <add>, %264, %cst_153 [1] : vector<16x32xf32> to vector<16xf32>
    %266 = vector.shape_cast %265 : vector<16xf32> to vector<16x1xf32>
    %cst_154 = arith.constant 0.0322580636 : f32
    %267 = vector.broadcast %cst_154 : f32 to vector<16x1xf32>
    %268 = arith.mulf %266, %267 : vector<16x1xf32>
    %269 = math.sqrt %268 : vector<16x1xf32>
    %cst_155 = arith.constant 9.99999997E-7 : f32
    %270 = vector.broadcast %cst_155 : f32 to vector<16x1xf32>
    %271 = arith.addf %269, %270 : vector<16x1xf32>
    %272 = tpu.reciprocal %271 {approx = true} : vector<16x1xf32> -> vector<16x1xf32>
    %273 = vector.broadcast %272 : vector<16x1xf32> to vector<16x32xf32>
    %274 = arith.mulf %263, %273 : vector<16x32xf32>
    %275 = vector.broadcast %256 : vector<1x32xf32> to vector<16x32xf32>
    %276 = arith.mulf %275, %274 : vector<16x32xf32>
    %277 = vector.broadcast %257 : vector<1x32xf32> to vector<16x32xf32>
    %278 = arith.addf %276, %277 : vector<16x32xf32>
    %279 = arith.truncf %278 : vector<16x32xf32> to vector<16x32xbf16>
    %c0_156 = arith.constant 0 : index
    %c0_157 = arith.constant 0 : index
    %280 = vector.load %arg11[%c0_156, %c0_157] : memref<32x64xbf16, #tpu.memory_space<vmem>>, vector<32x64xbf16>
    %cst_158 = arith.constant dense<0.000000e+00> : vector<16x64xf32>
    %281 = tpu.matmul %279, %280, %cst_158 {dimension_numbers = #tpu.dot_dimension_numbers<[1], [0], [0], [1], [0, 0, 1, 1], [], []>} : vector<16x32xbf16>, vector<32x64xbf16>, vector<16x64xf32> -> vector<16x64xf32>
    %c0_159 = arith.constant 0 : index
    %c0_160 = arith.constant 0 : index
    %282 = vector.load %arg12[%c0_159, %c0_160] : memref<1x64xf32, #tpu.memory_space<vmem>>, vector<1x64xf32>
    %283 = vector.broadcast %282 : vector<1x64xf32> to vector<16x64xf32>
    %284 = arith.addf %281, %283 : vector<16x64xf32>
    %cst_161 = arith.constant 0.000000e+00 : f32
    %285 = vector.broadcast %cst_161 : f32 to vector<16x64xf32>
    %286 = arith.maximumf %284, %285 : vector<16x64xf32>
    %287 = arith.truncf %286 : vector<16x64xf32> to vector<16x64xbf16>
    %c0_162 = arith.constant 0 : index
    %c0_163 = arith.constant 0 : index
    %288 = vector.load %arg13[%c0_162, %c0_163] : memref<64x32xbf16, #tpu.memory_space<vmem>>, vector<64x32xbf16>
    %cst_164 = arith.constant dense<0.000000e+00> : vector<16x32xf32>
    %289 = tpu.matmul %287, %288, %cst_164 {dimension_numbers = #tpu.dot_dimension_numbers<[1], [0], [0], [1], [0, 0, 1, 1], [], []>} : vector<16x64xbf16>, vector<64x32xbf16>, vector<16x32xf32> -> vector<16x32xf32>
    %c0_165 = arith.constant 0 : index
    %c0_166 = arith.constant 0 : index
    %290 = vector.load %arg14[%c0_165, %c0_166] : memref<1x32xf32, #tpu.memory_space<vmem>>, vector<1x32xf32>
    %291 = vector.broadcast %290 : vector<1x32xf32> to vector<16x32xf32>
    %292 = arith.addf %289, %291 : vector<16x32xf32>
    %293 = arith.addf %255, %292 : vector<16x32xf32>
    %294 = vector.shape_cast %293 : vector<16x32xf32> to vector<2x8x32xf32>
    %c0_167 = arith.constant 0 : index
    %c0_168 = arith.constant 0 : index
    %c0_169 = arith.constant 0 : index
    %295 = vector.load %arg21[%c0_167, %c0_168, %c0_169] : memref<2x8x32xf32, #tpu.memory_space<vmem>>, vector<2x8x32xf32>
    tpu.vector_store %arg21[%c0_167, %c0_168, %c0_169], %294 {strides = array<i32>} : memref<2x8x32xf32, #tpu.memory_space<vmem>>, vector<2x8x32xf32>,
    return
  }
  func.func @transform_0(%arg0: i32) -> (i32, i32, i32) {
    %c0_i32 = arith.constant 0 : i32
    %c0_i32_0 = arith.constant 0 : i32
    %c0_i32_1 = arith.constant 0 : i32
    return %arg0, %c0_i32, %c0_i32_0 : i32, i32, i32
  }
  func.func @transform_1(%arg0: i32) -> (i32, i32, i32) {
    %c0_i32 = arith.constant 0 : i32
    %c0_i32_0 = arith.constant 0 : i32
    %c0_i32_1 = arith.constant 0 : i32
    return %arg0, %c0_i32, %c0_i32_0 : i32, i32, i32
  }
  func.func @transform_2(%arg0: i32) -> (i32, i32) {
    %c0_i32 = arith.constant 0 : i32
    %c0_i32_0 = arith.constant 0 : i32
    %c0_i32_1 = arith.constant 0 : i32
    return %c0_i32, %c0_i32_0 : i32, i32
  }
  func.func @transform_3(%arg0: i32) -> (i32, i32) {
    %c0_i32 = arith.constant 0 : i32
    %c0_i32_0 = arith.constant 0 : i32
    %c0_i32_1 = arith.constant 0 : i32
    return %c0_i32, %c0_i32_0 : i32, i32
  }
  func.func @transform_4(%arg0: i32) -> (i32, i32) {
    %c0_i32 = arith.constant 0 : i32
    %c0_i32_0 = arith.constant 0 : i32
    %c0_i32_1 = arith.constant 0 : i32
    return %c0_i32, %c0_i32_0 : i32, i32
  }
  func.func @transform_5(%arg0: i32) -> (i32, i32) {
    %c0_i32 = arith.constant 0 : i32
    %c0_i32_0 = arith.constant 0 : i32
    %c0_i32_1 = arith.constant 0 : i32
    return %c0_i32, %c0_i32_0 : i32, i32
  }
  func.func @transform_6(%arg0: i32) -> (i32, i32) {
    %c0_i32 = arith.constant 0 : i32
    %c0_i32_0 = arith.constant 0 : i32
    %c0_i32_1 = arith.constant 0 : i32
    return %c0_i32, %c0_i32_0 : i32, i32
  }
  func.func @transform_7(%arg0: i32) -> (i32, i32) {
    %c0_i32 = arith.constant 0 : i32
    %c0_i32_0 = arith.constant 0 : i32
    %c0_i32_1 = arith.constant 0 : i32
    return %c0_i32, %c0_i32_0 : i32, i32
  }
  func.func @transform_8(%arg0: i32) -> (i32, i32) {
    %c0_i32 = arith.constant 0 : i32
    %c0_i32_0 = arith.constant 0 : i32
    %c0_i32_1 = arith.constant 0 : i32
    return %c0_i32, %c0_i32_0 : i32, i32
  }
  func.func @transform_9(%arg0: i32) -> (i32, i32) {
    %c0_i32 = arith.constant 0 : i32
    %c0_i32_0 = arith.constant 0 : i32
    %c0_i32_1 = arith.constant 0 : i32
    return %c0_i32, %c0_i32_0 : i32, i32
  }
  func.func @transform_10(%arg0: i32) -> (i32, i32) {
    %c0_i32 = arith.constant 0 : i32
    %c0_i32_0 = arith.constant 0 : i32
    %c0_i32_1 = arith.constant 0 : i32
    return %c0_i32, %c0_i32_0 : i32, i32
  }
  func.func @transform_11(%arg0: i32) -> (i32, i32) {
    %c0_i32 = arith.constant 0 : i32
    %c0_i32_0 = arith.constant 0 : i32
    %c0_i32_1 = arith.constant 0 : i32
    return %c0_i32, %c0_i32_0 : i32, i32
  }
  func.func @transform_12(%arg0: i32) -> (i32, i32) {
    %c0_i32 = arith.constant 0 : i32
    %c0_i32_0 = arith.constant 0 : i32
    %c0_i32_1 = arith.constant 0 : i32
    return %c0_i32, %c0_i32_0 : i32, i32
  }
  func.func @transform_13(%arg0: i32) -> (i32, i32) {
    %c0_i32 = arith.constant 0 : i32
    %c0_i32_0 = arith.constant 0 : i32
    %c0_i32_1 = arith.constant 0 : i32
    return %c0_i32, %c0_i32_0 : i32, i32
  }
  func.func @transform_14(%arg0: i32) -> (i32, i32) {
    %c0_i32 = arith.constant 0 : i32
    %c0_i32_0 = arith.constant 0 : i32
    %c0_i32_1 = arith.constant 0 : i32
    return %c0_i32, %c0_i32_0 : i32, i32
  }
  func.func @transform_15(%arg0: i32) -> (i32, i32) {
    %c0_i32 = arith.constant 0 : i32
    %c0_i32_0 = arith.constant 0 : i32
    %c0_i32_1 = arith.constant 0 : i32
    return %c0_i32, %c0_i32_0 : i32, i32
  }
  func.func @transform_16(%arg0: i32) -> (i32, i32) {
    %c0_i32 = arith.constant 0 : i32
    %c0_i32_0 = arith.constant 0 : i32
    %c0_i32_1 = arith.constant 0 : i32
    return %c0_i32, %c0_i32_0 : i32, i32
  }
  func.func @transform_17(%arg0: i32) -> (i32, i32) {
    %c0_i32 = arith.constant 0 : i32
    %c0_i32_0 = arith.constant 0 : i32
    %c0_i32_1 = arith.constant 0 : i32
    return %c0_i32, %c0_i32_0 : i32, i32
  }
  func.func @transform_18(%arg0: i32) -> (i32, i32) {
    %c0_i32 = arith.constant 0 : i32
    %c0_i32_0 = arith.constant 0 : i32
    %c0_i32_1 = arith.constant 0 : i32
    return %c0_i32, %c0_i32_0 : i32, i32
  }
  func.func @transform_19(%arg0: i32) -> (i32, i32) {
    %c0_i32 = arith.constant 0 : i32
    %c0_i32_0 = arith.constant 0 : i32
    %c0_i32_1 = arith.constant 0 : i32
    return %c0_i32, %c0_i32_0 : i32, i32
  }
  func.func @transform_20(%arg0: i32) -> (i32, i32, i32) {
    %c0_i32 = arith.constant 0 : i32
    %c0_i32_0 = arith.constant 0 : i32
    %c0_i32_1 = arith.constant 0 : i32
    return %arg0, %c0_i32, %c0_i32_0 : i32, i32, i32
  }
}

</mosaic_0001>

<llo_original>
// kernel: tpu_custom_call.1
$region0: #{tpu_custom_call.1}
  #allocation0 [shape = 'u32[]', space=smem, size = 0x4, offset = 0x4, fixed_abs, tag = 'smem constant byte address 0x4 - core index']
  #allocation1 [shape = 'u32[144,128]{1,0:T(1,128)}', space=vmem, size = 0x12000, scoped, tag = 'internal scratch']
  #allocation2 [shape = 'bf16[4,8,8]{2,1,0:T(8,128)(2,1)}', space=vmem, size = 0x2000, scoped, tag = 'scratch operand']
  #allocation3 [shape = 'bf16[4,8,8]{2,1,0:T(8,128)(2,1)}', space=vmem, size = 0x2000, scoped, tag = 'scratch operand']
  #allocation4 [shape = 'bf16[4,8,8]{2,1,0:T(8,128)(2,1)}', space=vmem, size = 0x2000, scoped, tag = 'scratch operand']
  #allocation5 [shape = 'bf16[16,32]{1,0:T(16,128)(2,1)}', space=vmem, size = 0x1000, scoped, tag = 'scratch operand']
  %s0 = inlined_call_operand.hbm [shape: f32[2,8,32], index: 0, kind: input, shape index: {}]
  %s1 = inlined_call_operand.hbm [shape: f32[2,1,8], index: 1, kind: input, shape index: {}]
  %s2 = inlined_call_operand.hbm [shape: bf16[32,32], index: 2, kind: input, shape index: {}]
  %s3 = inlined_call_operand.hbm [shape: f32[1,32], index: 3, kind: input, shape index: {}]
  %s4 = inlined_call_operand.hbm [shape: bf16[32,32], index: 4, kind: input, shape index: {}]
  %s5 = inlined_call_operand.hbm [shape: f32[1,32], index: 5, kind: input, shape index: {}]
  %s6 = inlined_call_operand.hbm [shape: bf16[32,32], index: 6, kind: input, shape index: {}]
  %s7 = inlined_call_operand.hbm [shape: f32[1,32], index: 7, kind: input, shape index: {}]
  %s8 = inlined_call_operand.hbm [shape: bf16[32,32], index: 8, kind: input, shape index: {}]
  %s9 = inlined_call_operand.hbm [shape: f32[1,32], index: 9, kind: input, shape index: {}]
  %s10 = inlined_call_operand.hbm [shape: bf16[32,64], index: 10, kind: input, shape index: {}]
  %s11 = inlined_call_operand.hbm [shape: f32[1,64], index: 11, kind: input, shape index: {}]
  %s12 = inlined_call_operand.hbm [shape: bf16[64,32], index: 12, kind: input, shape index: {}]
  %s13 = inlined_call_operand.hbm [shape: f32[1,32], index: 13, kind: input, shape index: {}]
  %s14 = inlined_call_operand.hbm [shape: f32[1,32], index: 14, kind: input, shape index: {}]
  %s15 = inlined_call_operand.hbm [shape: f32[1,32], index: 15, kind: input, shape index: {}]
  %s16 = inlined_call_operand.hbm [shape: f32[1,32], index: 16, kind: input, shape index: {}]
  %s17 = inlined_call_operand.hbm [shape: f32[1,32], index: 17, kind: input, shape index: {}]
  %s18 = inlined_call_operand.hbm [shape: f32[1,32], index: 18, kind: input, shape index: {}]
  %s19 = inlined_call_operand.hbm [shape: f32[1,32], index: 19, kind: input, shape index: {}]
  %s20 = inlined_call_operand.hbm [shape: f32[2,8,32], index: 20, kind: output, shape index: {}]
  %s21 = sld [smem:[#allocation0]]
  $region170: #{tpu_custom_call.1} parent=0
    _
  %s23 = ssub.s32 1, %s21
  %s24 = scalar_select 0, %s23, %s21
  $region1: #{tpu_custom_call.1} parent=0
    #allocation6 [shape = 'u8[8192]{0}', space=vmem, size = 0x2000, scoped, tag = 'input window, operand 0, single buffered']
    #allocation7 [shape = 's32[1]{0}', space=sflag, size = 0x4, scoped, tag = 'scoped memory for tpu_custom_call.1']
    #allocation8 [shape = 's32[1]{0}', space=sflag, size = 0x4, scoped, tag = 'scoped memory for tpu_custom_call.1']
    #allocation9 [shape = 'u8[1024]{0}', space=vmem, size = 0x400, scoped, tag = 'input window, operand 1, single buffered']
    #allocation10 [shape = 's32[1]{0}', space=sflag, size = 0x4, scoped, tag = 'scoped memory for tpu_custom_call.1']
    #allocation11 [shape = 'u8[8192]{0}', space=vmem, size = 0x2000, scoped, tag = 'input window, operand 2, single buffered']
    #allocation12 [shape = 'u8[512]{0}', space=vmem, size = 0x400, scoped, tag = 'input window, operand 3, single buffered']
    #allocation13 [shape = 's32[1]{0}', space=sflag, size = 0x4, scoped, tag = 'scoped memory for tpu_custom_call.1']
    #allocation14 [shape = 'u8[8192]{0}', space=vmem, size = 0x2000, scoped, tag = 'input window, operand 4, single buffered']
    #allocation15 [shape = 'u8[512]{0}', space=vmem, size = 0x400, scoped, tag = 'input window, operand 5, single buffered']
    #allocation16 [shape = 's32[1]{0}', space=sflag, size = 0x4, scoped, tag = 'scoped memory for tpu_custom_call.1']
    #allocation17 [shape = 'u8[8192]{0}', space=vmem, size = 0x2000, scoped, tag = 'input window, operand 6, single buffered']
    #allocation18 [shape = 'u8[512]{0}', space=vmem, size = 0x400, scoped, tag = 'input window, operand 7, single buffered']
    #allocation19 [shape = 's32[1]{0}', space=sflag, size = 0x4, scoped, tag = 'scoped memory for tpu_custom_call.1']
    #allocation20 [shape = 'u8[8192]{0}', space=vmem, size = 0x2000, scoped, tag = 'input window, operand 8, single buffered']
    #allocation21 [shape = 'u8[512]{0}', space=vmem, size = 0x400, scoped, tag = 'input window, operand 9, single buffered']
    #allocation22 [shape = 's32[1]{0}', space=sflag, size = 0x4, scoped, tag = 'scoped memory for tpu_custom_call.1']
    #allocation23 [shape = 'u8[8192]{0}', space=vmem, size = 0x2000, scoped, tag = 'input window, operand 10, single buffered']
    #allocation24 [shape = 'u8[512]{0}', space=vmem, size = 0x400, scoped, tag = 'input window, operand 11, single buffered']
    #allocation25 [shape = 's32[1]{0}', space=sflag, size = 0x4, scoped, tag = 'scoped memory for tpu_custom_call.1']
    #allocation26 [shape = 'u8[16384]{0}', space=vmem, size = 0x4000, scoped, tag = 'input window, operand 12, single buffered']
    #allocation27 [shape = 'u8[512]{0}', space=vmem, size = 0x400, scoped, tag = 'input window, operand 13, single buffered']
    #allocation28 [shape = 's32[1]{0}', space=sflag, size = 0x4, scoped, tag = 'scoped memory for tpu_custom_call.1']
    #allocation29 [shape = 'u8[512]{0}', space=vmem, size = 0x400, scoped, tag = 'input window, operand 14, single buffered']
    #allocation30 [shape = 'u8[512]{0}', space=vmem, size = 0x400, scoped, tag = 'input window, operand 15, single buffered']
    #allocation31 [shape = 's32[1]{0}', space=sflag, size = 0x4, scoped, tag = 'scoped memory for tpu_custom_call.1']
    #allocation32 [shape = 'u8[512]{0}', space=vmem, size = 0x400, scoped, tag = 'input window, operand 16, single buffered']
    #allocation33 [shape = 'u8[512]{0}', space=vmem, size = 0x400, scoped, tag = 'input window, operand 17, single buffered']
    #allocation34 [shape = 's32[1]{0}', space=sflag, size = 0x4, scoped, tag = 'scoped memory for tpu_custom_call.1']
    #allocation35 [shape = 'u8[512]{0}', space=vmem, size = 0x400, scoped, tag = 'input window, operand 18, single buffered']
    #allocation36 [shape = 'u8[512]{0}', space=vmem, size = 0x400, scoped, tag = 'input window, operand 19, single buffered']
    #allocation37 [shape = 's32[1]{0}', space=sflag, size = 0x4, scoped, tag = 'scoped memory for tpu_custom_call.1']
    #allocation38 [shape = 'u8[8192]{0}', space=vmem, size = 0x2000, scoped, tag = 'output window, operand 0, single buffered']
    %25 = vsyncpa [#allocation7], 0
    %26 = vsyncpa [#allocation10], 0
    %27 = vsyncpa [#allocation13], 0
    %28 = vsyncpa [#allocation16], 0
    %29 = vsyncpa [#allocation19], 0
    %30 = vsyncpa [#allocation22], 0
    %31 = vsyncpa [#allocation25], 0
    %32 = vsyncpa [#allocation28], 0
    %33 = vsyncpa [#allocation31], 0
    %34 = vsyncpa [#allocation34], 0
    %35 = vsyncpa [#allocation37], 0
    %36 = vsyncpa [#allocation8], 0
    // Predicated region
    $region2: #{tpu_custom_call.1} parent=1 // pred_check
      _
    $region3: #{tpu_custom_call.1} parent=1 // pred_check_branch
      %38 = sbr.rel (0) target = $region5
    $region4: #{tpu_custom_call.1} parent=1 // pred_region
      %s40 = ssub.s32 256, 256
      %41 = vsyncadd [#allocation7], %s40
      %s42 = sshll.u32 [#allocation6], 4
      %s43 = int_to_ptr.vmem [resolvable:$true] %s42
      %48 = dma.hbm_to_vmem [thread:$0]  %s0, 256, %s43, [#allocation7], 128, 128, 8
    $region5: #{tpu_custom_call.1} parent=1 // pred_fallthru
      _
    // Predicated region
    $region6: #{tpu_custom_call.1} parent=1 // pred_check
      _
    $region7: #{tpu_custom_call.1} parent=1 // pred_check_branch
      %50 = sbr.rel (0) target = $region9
    $region8: #{tpu_custom_call.1} parent=1 // pred_region
      %s52 = ssub.s32 32, 32
      %53 = vsyncadd [#allocation10], %s52
      %s54 = sshll.u32 [#allocation9], 4
      %s55 = int_to_ptr.vmem [resolvable:$true] %s54
      %60 = dma.hbm_to_vmem [thread:$0]  %s1, 32, %s55, [#allocation10], 16, 16, 1
    $region9: #{tpu_custom_call.1} parent=1 // pred_fallthru
      _
    // Predicated region
    $region10: #{tpu_custom_call.1} parent=1 // pred_check
      _
    $region11: #{tpu_custom_call.1} parent=1 // pred_check_branch
      %62 = sbr.rel (0) target = $region13
    $region12: #{tpu_custom_call.1} parent=1 // pred_region
      %s64 = ssub.s32 256, 256
      %65 = vsyncadd [#allocation10], %s64
      %s66 = sshll.u32 [#allocation11], 4
      %s67 = int_to_ptr.vmem [resolvable:$true] %s66
      %72 = dma.hbm_to_vmem [thread:$0]  %s2, 256, %s67, [#allocation10], 64, 64, 4
    $region13: #{tpu_custom_call.1} parent=1 // pred_fallthru
      _
    // Predicated region
    $region14: #{tpu_custom_call.1} parent=1 // pred_check
      _
    $region15: #{tpu_custom_call.1} parent=1 // pred_check_branch
      %74 = sbr.rel (0) target = $region17
    $region16: #{tpu_custom_call.1} parent=1 // pred_region
      %s76 = ssub.s32 16, 16
      %77 = vsyncadd [#allocation13], %s76
      %s79 = sshll.u32 [#allocation12], 4
      %s80 = int_to_ptr.vmem [resolvable:$true] %s79
      %82 = dma.hbm_to_vmem [thread:$0]  %s3, 16, %s80, [#allocation13]
    $region17: #{tpu_custom_call.1} parent=1 // pred_fallthru
      _
    // Predicated region
    $region18: #{tpu_custom_call.1} parent=1 // pred_check
      _
    $region19: #{tpu_custom_call.1} parent=1 // pred_check_branch
      %84 = sbr.rel (0) target = $region21
    $region20: #{tpu_custom_call.1} parent=1 // pred_region
      %s86 = ssub.s32 256, 256
      %87 = vsyncadd [#allocation13], %s86
      %s88 = sshll.u32 [#allocation14], 4
      %s89 = int_to_ptr.vmem [resolvable:$true] %s88
      %94 = dma.hbm_to_vmem [thread:$0]  %s4, 256, %s89, [#allocation13], 64, 64, 4
    $region21: #{tpu_custom_call.1} parent=1 // pred_fallthru
      _
    // Predicated region
    $region22: #{tpu_custom_call.1} parent=1 // pred_check
      _
    $region23: #{tpu_custom_call.1} parent=1 // pred_check_branch
      %96 = sbr.rel (0) target = $region25
    $region24: #{tpu_custom_call.1} parent=1 // pred_region
      %s98 = ssub.s32 16, 16
      %99 = vsyncadd [#allocation16], %s98
      %s101 = sshll.u32 [#allocation15], 4
      %s102 = int_to_ptr.vmem [resolvable:$true] %s101
      %104 = dma.hbm_to_vmem [thread:$0]  %s5, 16, %s102, [#allocation16]
    $region25: #{tpu_custom_call.1} parent=1 // pred_fallthru
      _
    // Predicated region
    $region26: #{tpu_custom_call.1} parent=1 // pred_check
      _
    $region27: #{tpu_custom_call.1} parent=1 // pred_check_branch
      %106 = sbr.rel (0) target = $region29
    $region28: #{tpu_custom_call.1} parent=1 // pred_region
      %s108 = ssub.s32 256, 256
      %109 = vsyncadd [#allocation16], %s108
      %s110 = sshll.u32 [#allocation17], 4
      %s111 = int_to_ptr.vmem [resolvable:$true] %s110
      %116 = dma.hbm_to_vmem [thread:$0]  %s6, 256, %s111, [#allocation16], 64, 64, 4
    $region29: #{tpu_custom_call.1} parent=1 // pred_fallthru
      _
    // Predicated region
    $region30: #{tpu_custom_call.1} parent=1 // pred_check
      _
    $region31: #{tpu_custom_call.1} parent=1 // pred_check_branch
      %118 = sbr.rel (0) target = $region33
    $region32: #{tpu_custom_call.1} parent=1 // pred_region
      %s120 = ssub.s32 16, 16
      %121 = vsyncadd [#allocation19], %s120
      %s123 = sshll.u32 [#allocation18], 4
      %s124 = int_to_ptr.vmem [resolvable:$true] %s123
      %126 = dma.hbm_to_vmem [thread:$0]  %s7, 16, %s124, [#allocation19]
    $region33: #{tpu_custom_call.1} parent=1 // pred_fallthru
      _
    // Predicated region
    $region34: #{tpu_custom_call.1} parent=1 // pred_check
      _
    $region35: #{tpu_custom_call.1} parent=1 // pred_check_branch
      %128 = sbr.rel (0) target = $region37
    $region36: #{tpu_custom_call.1} parent=1 // pred_region
      %s130 = ssub.s32 256, 256
      %131 = vsyncadd [#allocation19], %s130
      %s132 = sshll.u32 [#allocation20], 4
      %s133 = int_to_ptr.vmem [resolvable:$true] %s132
      %138 = dma.hbm_to_vmem [thread:$0]  %s8, 256, %s133, [#allocation19], 64, 64, 4
    $region37: #{tpu_custom_call.1} parent=1 // pred_fallthru
      _
    // Predicated region
    $region38: #{tpu_custom_call.1} parent=1 // pred_check
      _
    $region39: #{tpu_custom_call.1} parent=1 // pred_check_branch
      %140 = sbr.rel (0) target = $region41
    $region40: #{tpu_custom_call.1} parent=1 // pred_region
      %s142 = ssub.s32 16, 16
      %143 = vsyncadd [#allocation22], %s142
      %s145 = sshll.u32 [#allocation21], 4
      %s146 = int_to_ptr.vmem [resolvable:$true] %s145
      %148 = dma.hbm_to_vmem [thread:$0]  %s9, 16, %s146, [#allocation22]
    $region41: #{tpu_custom_call.1} parent=1 // pred_fallthru
      _
    // Predicated region
    $region42: #{tpu_custom_call.1} parent=1 // pred_check
      _
    $region43: #{tpu_custom_call.1} parent=1 // pred_check_branch
      %150 = sbr.rel (0) target = $region45
    $region44: #{tpu_custom_call.1} parent=1 // pred_region
      %s152 = ssub.s32 256, 256
      %153 = vsyncadd [#allocation22], %s152
      %s154 = sshll.u32 [#allocation23], 4
      %s155 = int_to_ptr.vmem [resolvable:$true] %s154
      %160 = dma.hbm_to_vmem [thread:$0]  %s10, 256, %s155, [#allocation22], 64, 64, 4
    $region45: #{tpu_custom_call.1} parent=1 // pred_fallthru
      _
    // Predicated region
    $region46: #{tpu_custom_call.1} parent=1 // pred_check
      _
    $region47: #{tpu_custom_call.1} parent=1 // pred_check_branch
      %162 = sbr.rel (0) target = $region49
    $region48: #{tpu_custom_call.1} parent=1 // pred_region
      %s164 = ssub.s32 16, 16
      %165 = vsyncadd [#allocation25], %s164
      %s167 = sshll.u32 [#allocation24], 4
      %s168 = int_to_ptr.vmem [resolvable:$true] %s167
      %170 = dma.hbm_to_vmem [thread:$0]  %s11, 16, %s168, [#allocation25]
    $region49: #{tpu_custom_call.1} parent=1 // pred_fallthru
      _
    // Predicated region
    $region50: #{tpu_custom_call.1} parent=1 // pred_check
      _
    $region51: #{tpu_custom_call.1} parent=1 // pred_check_branch
      %172 = sbr.rel (0) target = $region53
    $region52: #{tpu_custom_call.1} parent=1 // pred_region
      %s174 = ssub.s32 512, 512
      %175 = vsyncadd [#allocation25], %s174
      %s176 = sshll.u32 [#allocation26], 4
      %s177 = int_to_ptr.vmem [resolvable:$true] %s176
      %182 = dma.hbm_to_vmem [thread:$0]  %s12, 512, %s177, [#allocation25], 64, 64, 4
    $region53: #{tpu_custom_call.1} parent=1 // pred_fallthru
      _
    // Predicated region
    $region54: #{tpu_custom_call.1} parent=1 // pred_check
      _
    $region55: #{tpu_custom_call.1} parent=1 // pred_check_branch
      %184 = sbr.rel (0) target = $region57
    $region56: #{tpu_custom_call.1} parent=1 // pred_region
      %s186 = ssub.s32 16, 16
      %187 = vsyncadd [#allocation28], %s186
      %s189 = sshll.u32 [#allocation27], 4
      %s190 = int_to_ptr.vmem [resolvable:$true] %s189
      %192 = dma.hbm_to_vmem [thread:$0]  %s13, 16, %s190, [#allocation28]
    $region57: #{tpu_custom_call.1} parent=1 // pred_fallthru
      _
    // Predicated region
    $region58: #{tpu_custom_call.1} parent=1 // pred_check
      _
    $region59: #{tpu_custom_call.1} parent=1 // pred_check_branch
      %194 = sbr.rel (0) target = $region61
    $region60: #{tpu_custom_call.1} parent=1 // pred_region
      %s196 = ssub.s32 16, 16
      %197 = vsyncadd [#allocation28], %s196
      %s199 = sshll.u32 [#allocation29], 4
      %s200 = int_to_ptr.vmem [resolvable:$true] %s199
      %202 = dma.hbm_to_vmem [thread:$0]  %s14, 16, %s200, [#allocation28]
    $region61: #{tpu_custom_call.1} parent=1 // pred_fallthru
      _
    // Predicated region
    $region62: #{tpu_custom_call.1} parent=1 // pred_check
      _
    $region63: #{tpu_custom_call.1} parent=1 // pred_check_branch
      %204 = sbr.rel (0) target = $region65
    $region64: #{tpu_custom_call.1} parent=1 // pred_region
      %s206 = ssub.s32 16, 16
      %207 = vsyncadd [#allocation31], %s206
      %s209 = sshll.u32 [#allocation30], 4
      %s210 = int_to_ptr.vmem [resolvable:$true] %s209
      %212 = dma.hbm_to_vmem [thread:$0]  %s15, 16, %s210, [#allocation31]
    $region65: #{tpu_custom_call.1} parent=1 // pred_fallthru
      _
    // Predicated region
    $region66: #{tpu_custom_call.1} parent=1 // pred_check
      _
    $region67: #{tpu_custom_call.1} parent=1 // pred_check_branch
      %214 = sbr.rel (0) target = $region69
    $region68: #{tpu_custom_call.1} parent=1 // pred_region
      %s216 = ssub.s32 16, 16
      %217 = vsyncadd [#allocation31], %s216
      %s219 = sshll.u32 [#allocation32], 4
      %s220 = int_to_ptr.vmem [resolvable:$true] %s219
      %222 = dma.hbm_to_vmem [thread:$0]  %s16, 16, %s220, [#allocation31]
    $region69: #{tpu_custom_call.1} parent=1 // pred_fallthru
      _
    // Predicated region
    $region70: #{tpu_custom_call.1} parent=1 // pred_check
      _
    $region71: #{tpu_custom_call.1} parent=1 // pred_check_branch
      %224 = sbr.rel (0) target = $region73
    $region72: #{tpu_custom_call.1} parent=1 // pred_region
      %s226 = ssub.s32 16, 16
      %227 = vsyncadd [#allocation34], %s226
      %s229 = sshll.u32 [#allocation33], 4
      %s230 = int_to_ptr.vmem [resolvable:$true] %s229
      %232 = dma.hbm_to_vmem [thread:$0]  %s17, 16, %s230, [#allocation34]
    $region73: #{tpu_custom_call.1} parent=1 // pred_fallthru
      _
    // Predicated region
    $region74: #{tpu_custom_call.1} parent=1 // pred_check
      _
    $region75: #{tpu_custom_call.1} parent=1 // pred_check_branch
      %234 = sbr.rel (0) target = $region77
    $region76: #{tpu_custom_call.1} parent=1 // pred_region
      %s236 = ssub.s32 16, 16
      %237 = vsyncadd [#allocation34], %s236
      %s239 = sshll.u32 [#allocation35], 4
      %s240 = int_to_ptr.vmem [resolvable:$true] %s239
      %242 = dma.hbm_to_vmem [thread:$0]  %s18, 16, %s240, [#allocation34]
    $region77: #{tpu_custom_call.1} parent=1 // pred_fallthru
      _
    // Predicated region
    $region78: #{tpu_custom_call.1} parent=1 // pred_check
      _
    $region79: #{tpu_custom_call.1} parent=1 // pred_check_branch
      %244 = sbr.rel (0) target = $region81
    $region80: #{tpu_custom_call.1} parent=1 // pred_region
      %s246 = ssub.s32 16, 16
      %247 = vsyncadd [#allocation37], %s246
      %s249 = sshll.u32 [#allocation36], 4
      %s250 = int_to_ptr.vmem [resolvable:$true] %s249
      %252 = dma.hbm_to_vmem [thread:$0]  %s19, 16, %s250, [#allocation37]
    $region81: #{tpu_custom_call.1} parent=1 // pred_fallthru
      _
    // Predicated region
    $region82: #{tpu_custom_call.1} parent=1 // pred_check
      _
    $region83: #{tpu_custom_call.1} parent=1 // pred_check_branch
      %254 = sbr.rel (0) target = $region85
    $region84: #{tpu_custom_call.1} parent=1 // pred_region
      %255 = dma.done [#allocation7], 256
    $region85: #{tpu_custom_call.1} parent=1 // pred_fallthru
      _
    // Predicated region
    $region86: #{tpu_custom_call.1} parent=1 // pred_check
      _
    $region87: #{tpu_custom_call.1} parent=1 // pred_check_branch
      %257 = sbr.rel (0) target = $region89
    $region88: #{tpu_custom_call.1} parent=1 // pred_region
      %258 = dma.done [#allocation10], 32
    $region89: #{tpu_custom_call.1} parent=1 // pred_fallthru
      _
    // Predicated region
    $region90: #{tpu_custom_call.1} parent=1 // pred_check
      _
    $region91: #{tpu_custom_call.1} parent=1 // pred_check_branch
      %260 = sbr.rel (0) target = $region93
    $region92: #{tpu_custom_call.1} parent=1 // pred_region
      %261 = dma.done [#allocation10], 256
    $region93: #{tpu_custom_call.1} parent=1 // pred_fallthru
      _
    // Predicated region
    $region94: #{tpu_custom_call.1} parent=1 // pred_check
      _
    $region95: #{tpu_custom_call.1} parent=1 // pred_check_branch
      %263 = sbr.rel (0) target = $region97
    $region96: #{tpu_custom_call.1} parent=1 // pred_region
      %264 = dma.done [#allocation13], 16
    $region97: #{tpu_custom_call.1} parent=1 // pred_fallthru
      _
    // Predicated region
    $region98: #{tpu_custom_call.1} parent=1 // pred_check
      _
    $region99: #{tpu_custom_call.1} parent=1 // pred_check_branch
      %266 = sbr.rel (0) target = $region101
    $region100: #{tpu_custom_call.1} parent=1 // pred_region
      %267 = dma.done [#allocation13], 256
    $region101: #{tpu_custom_call.1} parent=1 // pred_fallthru
      _
    // Predicated region
    $region102: #{tpu_custom_call.1} parent=1 // pred_check
      _
    $region103: #{tpu_custom_call.1} parent=1 // pred_check_branch
      %269 = sbr.rel (0) target = $region105
    $region104: #{tpu_custom_call.1} parent=1 // pred_region
      %270 = dma.done [#allocation16], 16
    $region105: #{tpu_custom_call.1} parent=1 // pred_fallthru
      _
    // Predicated region
    $region106: #{tpu_custom_call.1} parent=1 // pred_check
      _
    $region107: #{tpu_custom_call.1} parent=1 // pred_check_branch
      %272 = sbr.rel (0) target = $region109
    $region108: #{tpu_custom_call.1} parent=1 // pred_region
      %273 = dma.done [#allocation16], 256
    $region109: #{tpu_custom_call.1} parent=1 // pred_fallthru
      _
    // Predicated region
    $region110: #{tpu_custom_call.1} parent=1 // pred_check
      _
    $region111: #{tpu_custom_call.1} parent=1 // pred_check_branch
      %275 = sbr.rel (0) target = $region113
    $region112: #{tpu_custom_call.1} parent=1 // pred_region
      %276 = dma.done [#allocation19], 16
    $region113: #{tpu_custom_call.1} parent=1 // pred_fallthru
      _
    // Predicated region
    $region114: #{tpu_custom_call.1} parent=1 // pred_check
      _
    $region115: #{tpu_custom_call.1} parent=1 // pred_check_branch
      %278 = sbr.rel (0) target = $region117
    $region116: #{tpu_custom_call.1} parent=1 // pred_region
      %279 = dma.done [#allocation19], 256
    $region117: #{tpu_custom_call.1} parent=1 // pred_fallthru
      _
    // Predicated region
    $region118: #{tpu_custom_call.1} parent=1 // pred_check
      _
    $region119: #{tpu_custom_call.1} parent=1 // pred_check_branch
      %281 = sbr.rel (0) target = $region121
    $region120: #{tpu_custom_call.1} parent=1 // pred_region
      %282 = dma.done [#allocation22], 16
    $region121: #{tpu_custom_call.1} parent=1 // pred_fallthru
      _
    // Predicated region
    $region122: #{tpu_custom_call.1} parent=1 // pred_check
      _
    $region123: #{tpu_custom_call.1} parent=1 // pred_check_branch
      %284 = sbr.rel (0) target = $region125
    $region124: #{tpu_custom_call.1} parent=1 // pred_region
      %285 = dma.done [#allocation22], 256
    $region125: #{tpu_custom_call.1} parent=1 // pred_fallthru
      _
    // Predicated region
    $region126: #{tpu_custom_call.1} parent=1 // pred_check
      _
    $region127: #{tpu_custom_call.1} parent=1 // pred_check_branch
      %287 = sbr.rel (0) target = $region129
    $region128: #{tpu_custom_call.1} parent=1 // pred_region
      %288 = dma.done [#allocation25], 16
    $region129: #{tpu_custom_call.1} parent=1 // pred_fallthru
      _
    // Predicated region
    $region130: #{tpu_custom_call.1} parent=1 // pred_check
      _
    $region131: #{tpu_custom_call.1} parent=1 // pred_check_branch
      %290 = sbr.rel (0) target = $region133
    $region132: #{tpu_custom_call.1} parent=1 // pred_region
      %291 = dma.done [#allocation25], 512
    $region133: #{tpu_custom_call.1} parent=1 // pred_fallthru
      _
    // Predicated region
    $region134: #{tpu_custom_call.1} parent=1 // pred_check
      _
    $region135: #{tpu_custom_call.1} parent=1 // pred_check_branch
      %293 = sbr.rel (0) target = $region137
    $region136: #{tpu_custom_call.1} parent=1 // pred_region
      %294 = dma.done [#allocation28], 16
    $region137: #{tpu_custom_call.1} parent=1 // pred_fallthru
      _
    // Predicated region
    $region138: #{tpu_custom_call.1} parent=1 // pred_check
      _
    $region139: #{tpu_custom_call.1} parent=1 // pred_check_branch
      %296 = sbr.rel (0) target = $region141
    $region140: #{tpu_custom_call.1} parent=1 // pred_region
      %297 = dma.done [#allocation28], 16
    $region141: #{tpu_custom_call.1} parent=1 // pred_fallthru
      _
    // Predicated region
    $region142: #{tpu_custom_call.1} parent=1 // pred_check
      _
    $region143: #{tpu_custom_call.1} parent=1 // pred_check_branch
      %299 = sbr.rel (0) target = $region145
    $region144: #{tpu_custom_call.1} parent=1 // pred_region
      %300 = dma.done [#allocation31], 16
    $region145: #{tpu_custom_call.1} parent=1 // pred_fallthru
      _
    // Predicated region
    $region146: #{tpu_custom_call.1} parent=1 // pred_check
      _
    $region147: #{tpu_custom_call.1} parent=1 // pred_check_branch
      %302 = sbr.rel (0) target = $region149
    $region148: #{tpu_custom_call.1} parent=1 // pred_region
      %303 = dma.done [#allocation31], 16
    $region149: #{tpu_custom_call.1} parent=1 // pred_fallthru
      _
    // Predicated region
    $region150: #{tpu_custom_call.1} parent=1 // pred_check
      _
    $region151: #{tpu_custom_call.1} parent=1 // pred_check_branch
      %305 = sbr.rel (0) target = $region153
    $region152: #{tpu_custom_call.1} parent=1 // pred_region
      %306 = dma.done [#allocation34], 16
    $region153: #{tpu_custom_call.1} parent=1 // pred_fallthru
      _
    // Predicated region
    $region154: #{tpu_custom_call.1} parent=1 // pred_check
      _
    $region155: #{tpu_custom_call.1} parent=1 // pred_check_branch
      %308 = sbr.rel (0) target = $region157
    $region156: #{tpu_custom_call.1} parent=1 // pred_region
      %309 = dma.done [#allocation34], 16
    $region157: #{tpu_custom_call.1} parent=1 // pred_fallthru
      _
    // Predicated region
    $region158: #{tpu_custom_call.1} parent=1 // pred_check
      _
    $region159: #{tpu_custom_call.1} parent=1 // pred_check_branch
      %311 = sbr.rel (0) target = $region161
    $region160: #{tpu_custom_call.1} parent=1 // pred_region
      %312 = dma.done [#allocation37], 16
    $region161: #{tpu_custom_call.1} parent=1 // pred_fallthru
      _
    %v314 = vld [vmem:[#allocation6] sm:$0xff]
    %v315 = vld [vmem:[#allocation6 + $0x8] sm:$0xff]
    %v316 = vld [vmem:[#allocation9] sm:$0x1]
    %v317 = vld [vmem:[#allocation9 + $0x1] sm:$0x1]
    %vm318 = vcmp.eq.f32.partialorder %v316, 0.0
    %vm319 = vcmp.eq.f32.partialorder %v317, 0.0
    %v320 = vsel %vm318, -1e+09, 0.0
    %v321 = vsel %vm319, -1e+09, 0.0
    %v322 = vld [vmem:[#allocation29] sm:$0x1]
    %v323 = vld [vmem:[#allocation30] sm:$0x1]
    %vm324 = vcmask 261120
    %v325 = vsel %vm324, %v314, 0.0
    %326 = vadd.xlane.f32.xlu0 %v325
    %v327 = vpop.xlane.xlu0 %326
    %v328 = vsel %vm324, %v315, 0.0
    %329 = vadd.xlane.f32.xlu0 %v328
    %v330 = vpop.xlane.xlu0 %329
    %v331 = vrcp.pop 32.0
    %v332 = vmul.f32 %v327, %v331
    %v333 = vmul.f32 %v330, %v331
    %v334 = vsub.f32 %v314, %v332
    %v335 = vsub.f32 %v315, %v333
    %v336 = vmul.f32 %v334, %v334
    %v337 = vmul.f32 %v335, %v335
    %v338 = vsel %vm324, %v336, 0.0
    %339 = vadd.xlane.f32.xlu0 %v338
    %v340 = vpop.xlane.xlu0 %339
    %v341 = vsel %vm324, %v337, 0.0
    %342 = vadd.xlane.f32.xlu0 %v341
    %v343 = vpop.xlane.xlu0 %342
    %v344 = vmul.f32 %v340, 0.032258064
    %v345 = vmul.f32 %v343, 0.032258064
    %v346 = vrsqrt.pop %v344
    %v347 = vmul.f32 %v344, %v346
    %vm348 = vcmp.eq.f32.partialorder %v344, inf
    %v349 = vsel %vm348, %v344, %v347
    %vm350 = vcmp.eq.f32.partialorder %v344, 0.0
    %v351 = vand.u32 %v344, 2147483648
    %v352 = vsel %vm350, %v351, %v349
    %v353 = vrsqrt.pop %v345
    %v354 = vmul.f32 %v345, %v353
    %vm355 = vcmp.eq.f32.partialorder %v345, inf
    %v356 = vsel %vm355, %v345, %v354
    %vm357 = vcmp.eq.f32.partialorder %v345, 0.0
    %v358 = vand.u32 %v345, 2147483648
    %v359 = vsel %vm357, %v358, %v356
    %v360 = vadd.f32 %v352, 1e-06
    %v361 = vadd.f32 %v359, 1e-06
    %v362 = vrcp.pop %v360
    %v363 = vrcp.pop %v361
    %v364 = vmul.f32 %v334, %v362
    %v365 = vmul.f32 %v335, %v363
    %v367 = vlaneseq
    %v368 = vshrl.u32 %v367, 7
    %v369 = vsub.s32 0, %v368
    %v370 = vrot.slane %v322, %v369
    %v372 = vmul.f32 %v370, %v364
    %v373 = vmul.f32 %v370, %v365
    %v375 = vlaneseq
    %v376 = vshrl.u32 %v375, 7
    %v377 = vsub.s32 0, %v376
    %v378 = vrot.slane %v323, %v377
    %v380 = vadd.f32 %v372, %v378
    %v381 = vadd.f32 %v373, %v378
    %v382 = vpack.c.bf16 %v381, %v380
    %v383 = vld [vmem:[#allocation11] sm:$0xf]
    %v384 = vld [vmem:[#allocation11 + $0x4] sm:$0xf]
    %v385 = vld [vmem:[#allocation11 + $0x8] sm:$0xf]
    %v386 = vld [vmem:[#allocation11 + $0xc] sm:$0xf]
    %v387 = vld [vmem:[#allocation12] sm:$0x1]
    %v389 = vlaneseq
    %v390 = vshrl.u32 %v389, 7
    %v391 = vsub.s32 0, %v390
    %v392 = vrot.slane %v387, %v391
    %v398 = vunpack.c.l.b16 %v383
    %v399 = vunpack.c.l.b16 %v384
    %v400 = vunpack.c.l.b16 %v385
    %v401 = vunpack.c.l.b16 %v386
    %v402 = vpack.c.b16 %v399, %v398
    %v403 = vpack.c.b16 %v401, %v400
    %v407 = vsel %vm324, %v382, 0
    %409 = vmatprep.subr.bf16.mxu0 0
    %410 = vmatpush1.bf16.msra.mxu0 %v402
    %411 = vmatprep.subr.bf16.mxu0 0
    %412 = vmatpush1.bf16.msra.mxu0 %v403
    %413 = vmatprep.subr.bf16.mxu0 0
    %414 = vmatpush1.bf16.msra.mxu0 0
    %415 = vmatprep.subr.bf16.mxu0 0
    %416 = vmatpush1.bf16.msra.mxu0 0
    %417 = vmatprep.subr.bf16.mxu0 0
    %418 = vmatpush1.bf16.msra.mxu0 0
    %419 = vmatprep.subr.bf16.mxu0 0
    %420 = vmatpush1.bf16.msra.mxu0 0
    %421 = vmatprep.subr.bf16.mxu0 0
    %422 = vmatpush1.bf16.msra.mxu0 0
    %423 = vmatprep.subr.bf16.mxu0 0
    %424 = vmatpush1.bf16.msra.mxu0 0
    %425 = vmatprep.subr.bf16.mxu0 0
    %426 = vmatpush1.bf16.msra.mxu0 0
    %427 = vmatprep.subr.bf16.mxu0 0
    %428 = vmatpush1.bf16.msra.mxu0 0
    %429 = vmatprep.subr.bf16.mxu0 0
    %430 = vmatpush1.bf16.msra.mxu0 0
    %431 = vmatprep.subr.bf16.mxu0 0
    %432 = vmatpush1.bf16.msra.mxu0 0
    %433 = vmatprep.subr.bf16.mxu0 0
    %434 = vmatpush1.bf16.msra.mxu0 0
    %435 = vmatprep.subr.bf16.mxu0 0
    %436 = vmatpush1.bf16.msra.mxu0 0
    %437 = vmatprep.subr.bf16.mxu0 0
    %438 = vmatpush1.bf16.msra.mxu0 0
    %439 = vmatprep.subr.bf16.mxu0 0
    %440 = vmatpush1.bf16.msra.mxu0 0
    %441 = vmatprep.mubr.bf16.mxu0 0
    %442 = vmatmul.mubr.bf16.gmra.mrb[0].mxu0 %v407
    %v443 = vpop.f32.mrb[0].mxu0
    %v444 = vadd.f32 %v392, %v443
    %v445 = vpop.f32.mrb[0].mxu0
    %v446 = vpop.f32.mrb[0].mxu0
    %v447 = vadd.f32 %v392, %v446
    %v448 = vpop.f32.mrb[0].mxu0
    %449 = vdwg.mxu0
    %v450 = vld [vmem:[#allocation14] sm:$0xf]
    %v451 = vld [vmem:[#allocation14 + $0x4] sm:$0xf]
    %v452 = vld [vmem:[#allocation14 + $0x8] sm:$0xf]
    %v453 = vld [vmem:[#allocation14 + $0xc] sm:$0xf]
    %v454 = vld [vmem:[#allocation15] sm:$0x1]
    %v456 = vlaneseq
    %v457 = vshrl.u32 %v456, 7
    %v458 = vsub.s32 0, %v457
    %v459 = vrot.slane %v454, %v458
    %v465 = vunpack.c.l.b16 %v450
    %v466 = vunpack.c.l.b16 %v451
    %v467 = vunpack.c.l.b16 %v452
    %v468 = vunpack.c.l.b16 %v453
    %v469 = vpack.c.b16 %v466, %v465
    %v470 = vpack.c.b16 %v468, %v467
    %473 = vmatprep.subr.bf16.mxu0 0
    %474 = vmatpush1.bf16.msra.mxu0 %v469
    %475 = vmatprep.subr.bf16.mxu0 0
    %476 = vmatpush1.bf16.msra.mxu0 %v470
    %477 = vmatprep.subr.bf16.mxu0 0
    %478 = vmatpush1.bf16.msra.mxu0 0
    %479 = vmatprep.subr.bf16.mxu0 0
    %480 = vmatpush1.bf16.msra.mxu0 0
    %481 = vmatprep.subr.bf16.mxu0 0
    %482 = vmatpush1.bf16.msra.mxu0 0
    %483 = vmatprep.subr.bf16.mxu0 0
    %484 = vmatpush1.bf16.msra.mxu0 0
    %485 = vmatprep.subr.bf16.mxu0 0
    %486 = vmatpush1.bf16.msra.mxu0 0
    %487 = vmatprep.subr.bf16.mxu0 0
    %488 = vmatpush1.bf16.msra.mxu0 0
    %489 = vmatprep.subr.bf16.mxu0 0
    %490 = vmatpush1.bf16.msra.mxu0 0
    %491 = vmatprep.subr.bf16.mxu0 0
    %492 = vmatpush1.bf16.msra.mxu0 0
    %493 = vmatprep.subr.bf16.mxu0 0
    %494 = vmatpush1.bf16.msra.mxu0 0
    %495 = vmatprep.subr.bf16.mxu0 0
    %496 = vmatpush1.bf16.msra.mxu0 0
    %497 = vmatprep.subr.bf16.mxu0 0
    %498 = vmatpush1.bf16.msra.mxu0 0
    %499 = vmatprep.subr.bf16.mxu0 0
    %500 = vmatpush1.bf16.msra.mxu0 0
    %501 = vmatprep.subr.bf16.mxu0 0
    %502 = vmatpush1.bf16.msra.mxu0 0
    %503 = vmatprep.subr.bf16.mxu0 0
    %504 = vmatpush1.bf16.msra.mxu0 0
    %505 = vmatprep.mubr.bf16.mxu0 0
    %506 = vmatmul.mubr.bf16.gmra.mrb[0].mxu0 %v407
    %v507 = vpop.f32.mrb[0].mxu0
    %v508 = vadd.f32 %v459, %v507
    %v509 = vpop.f32.mrb[0].mxu0
    %v510 = vpop.f32.mrb[0].mxu0
    %v511 = vadd.f32 %v459, %v510
    %v512 = vpop.f32.mrb[0].mxu0
    %513 = vdwg.mxu0
    %v514 = vld [vmem:[#allocation17] sm:$0xf]
    %v515 = vld [vmem:[#allocation17 + $0x4] sm:$0xf]
    %v516 = vld [vmem:[#allocation17 + $0x8] sm:$0xf]
    %v517 = vld [vmem:[#allocation17 + $0xc] sm:$0xf]
    %v518 = vld [vmem:[#allocation18] sm:$0x1]
    %v520 = vlaneseq
    %v521 = vshrl.u32 %v520, 7
    %v522 = vsub.s32 0, %v521
    %v523 = vrot.slane %v518, %v522
    %v529 = vunpack.c.l.b16 %v514
    %v530 = vunpack.c.l.b16 %v515
    %v531 = vunpack.c.l.b16 %v516
    %v532 = vunpack.c.l.b16 %v517
    %v533 = vpack.c.b16 %v530, %v529
    %v534 = vpack.c.b16 %v532, %v531
    %537 = vmatprep.subr.bf16.mxu0 0
    %538 = vmatpush1.bf16.msra.mxu0 %v533
    %539 = vmatprep.subr.bf16.mxu0 0
    %540 = vmatpush1.bf16.msra.mxu0 %v534
    %541 = vmatprep.subr.bf16.mxu0 0
    %542 = vmatpush1.bf16.msra.mxu0 0
    %543 = vmatprep.subr.bf16.mxu0 0
    %544 = vmatpush1.bf16.msra.mxu0 0
    %545 = vmatprep.subr.bf16.mxu0 0
    %546 = vmatpush1.bf16.msra.mxu0 0
    %547 = vmatprep.subr.bf16.mxu0 0
    %548 = vmatpush1.bf16.msra.mxu0 0
    %549 = vmatprep.subr.bf16.mxu0 0
    %550 = vmatpush1.bf16.msra.mxu0 0
    %551 = vmatprep.subr.bf16.mxu0 0
    %552 = vmatpush1.bf16.msra.mxu0 0
    %553 = vmatprep.subr.bf16.mxu0 0
    %554 = vmatpush1.bf16.msra.mxu0 0
    %555 = vmatprep.subr.bf16.mxu0 0
    %556 = vmatpush1.bf16.msra.mxu0 0
    %557 = vmatprep.subr.bf16.mxu0 0
    %558 = vmatpush1.bf16.msra.mxu0 0
    %559 = vmatprep.subr.bf16.mxu0 0
    %560 = vmatpush1.bf16.msra.mxu0 0
    %561 = vmatprep.subr.bf16.mxu0 0
    %562 = vmatpush1.bf16.msra.mxu0 0
    %563 = vmatprep.subr.bf16.mxu0 0
    %564 = vmatpush1.bf16.msra.mxu0 0
    %565 = vmatprep.subr.bf16.mxu0 0
    %566 = vmatpush1.bf16.msra.mxu0 0
    %567 = vmatprep.subr.bf16.mxu0 0
    %568 = vmatpush1.bf16.msra.mxu0 0
    %569 = vmatprep.mubr.bf16.mxu0 0
    %570 = vmatmul.mubr.bf16.gmra.mrb[0].mxu0 %v407
    %v571 = vpop.f32.mrb[0].mxu0
    %v572 = vadd.f32 %v523, %v571
    %v573 = vpop.f32.mrb[0].mxu0
    %v574 = vpop.f32.mrb[0].mxu0
    %v575 = vadd.f32 %v523, %v574
    %v576 = vpop.f32.mrb[0].mxu0
    %577 = vdwg.mxu0
    %v578 = vmul.f32 %v444, 0.35355338
    %v579 = vmul.f32 %v447, 0.35355338
    %v580 = vpack.c.bf16 %v578, %v578
    %vm581 = vcmask 60416
    %582 = vst.msk [vmem:[#allocation2] sm:$0xf] %vm581, %v580
    %v583 = vpack.c.bf16 %v508, %v508
    %584 = vst.msk [vmem:[#allocation3] sm:$0xf] %vm581, %v583
    %v585 = vpack.c.bf16 %v572, %v572
    %586 = vst.msk [vmem:[#allocation4] sm:$0xf] %vm581, %v585
    %v588 = vunpack.c.l.b16 %v580
    %v589 = vpack.c.b16 %v588, %v588
    %590 = vrot.lane.b32.xlu0 %v589, 120
    %v591 = vpop.permute.xlu0 %590
    %s593 = scalar_lea.vmem [#allocation2], 4
    %594 = vst.msk [vmem:[%s593] sm:$0xf] %vm581, %v591
    %v596 = vunpack.c.l.b16 %v583
    %v597 = vpack.c.b16 %v596, %v596
    %598 = vrot.lane.b32.xlu0 %v597, 120
    %v599 = vpop.permute.xlu0 %598
    %s601 = scalar_lea.vmem [#allocation3], 4
    %602 = vst.msk [vmem:[%s601] sm:$0xf] %vm581, %v599
    %v604 = vunpack.c.l.b16 %v585
    %v605 = vpack.c.b16 %v604, %v604
    %606 = vrot.lane.b32.xlu0 %v605, 120
    %v607 = vpop.permute.xlu0 %606
    %s609 = scalar_lea.vmem [#allocation4], 4
    %610 = vst.msk [vmem:[%s609] sm:$0xf] %vm581, %v607
    %611 = vrot.lane.b32.xlu0 %v589, 112
    %v612 = vpop.permute.xlu0 %611
    %s614 = scalar_lea.vmem [#allocation2], 8
    %615 = vst.msk [vmem:[%s614] sm:$0xf] %vm581, %v612
    %616 = vrot.lane.b32.xlu0 %v597, 112
    %v617 = vpop.permute.xlu0 %616
    %s619 = scalar_lea.vmem [#allocation3], 8
    %620 = vst.msk [vmem:[%s619] sm:$0xf] %vm581, %v617
    %621 = vrot.lane.b32.xlu0 %v605, 112
    %v622 = vpop.permute.xlu0 %621
    %s624 = scalar_lea.vmem [#allocation4], 8
    %625 = vst.msk [vmem:[%s624] sm:$0xf] %vm581, %v622
    %626 = vrot.lane.b32.xlu0 %v589, 104
    %v627 = vpop.permute.xlu0 %626
    %s629 = scalar_lea.vmem [#allocation2], 12
    %630 = vst.msk [vmem:[%s629] sm:$0xf] %vm581, %v627
    %631 = vrot.lane.b32.xlu0 %v597, 104
    %v632 = vpop.permute.xlu0 %631
    %s634 = scalar_lea.vmem [#allocation3], 12
    %635 = vst.msk [vmem:[%s634] sm:$0xf] %vm581, %v632
    %636 = vrot.lane.b32.xlu0 %v605, 104
    %v637 = vpop.permute.xlu0 %636
    %s639 = scalar_lea.vmem [#allocation4], 12
    %640 = vst.msk [vmem:[%s639] sm:$0xf] %vm581, %v637
    %v641 = vld [vmem:[#allocation2] sm:$0xf]
    %v642 = vld [vmem:[#allocation2 + $0x4] sm:$0xf]
    %v643 = vld [vmem:[#allocation2 + $0x8] sm:$0xf]
    %v644 = vld [vmem:[#allocation2 + $0xc] sm:$0xf]
    %v645 = vld [vmem:[#allocation3] sm:$0xf]
    %v646 = vld [vmem:[#allocation3 + $0x4] sm:$0xf]
    %v647 = vld [vmem:[#allocation3 + $0x8] sm:$0xf]
    %v648 = vld [vmem:[#allocation3 + $0xc] sm:$0xf]
    %v649 = vld [vmem:[#allocation4] sm:$0xf]
    %v650 = vld [vmem:[#allocation4 + $0x4] sm:$0xf]
    %v651 = vld [vmem:[#allocation4 + $0x8] sm:$0xf]
    %v652 = vld [vmem:[#allocation4 + $0xc] sm:$0xf]
    %v654 = vlaneseq
    %v655 = vshrl.u32 %v654, 7
    %v656 = vsub.s32 0, %v655
    %v657 = vrot.slane %v320, %v656
    %vm659 = vcmask 64512
    %v661 = vsel %vm659, %v641, 0
    %v664 = vsel %vm659, %v645, 0
    %666 = vmatprep.subr.bf16.mxu0 0
    %667 = vmatpush1.bf16.xpose.msra.mxu0 %v664
    %668 = vmatprep.subr.bf16.mxu0 0
    %669 = vmatpush1.bf16.xpose.msra.mxu0 0
    %670 = vmatprep.subr.bf16.mxu0 0
    %671 = vmatpush1.bf16.xpose.msra.mxu0 0
    %672 = vmatprep.subr.bf16.mxu0 0
    %673 = vmatpush1.bf16.xpose.msra.mxu0 0
    %674 = vmatprep.subr.bf16.mxu0 0
    %675 = vmatpush1.bf16.xpose.msra.mxu0 0
    %676 = vmatprep.subr.bf16.mxu0 0
    %677 = vmatpush1.bf16.xpose.msra.mxu0 0
    %678 = vmatprep.subr.bf16.mxu0 0
    %679 = vmatpush1.bf16.xpose.msra.mxu0 0
    %680 = vmatprep.subr.bf16.mxu0 0
    %681 = vmatpush1.bf16.xpose.msra.mxu0 0
    %682 = vmatprep.subr.bf16.mxu0 0
    %683 = vmatpush1.bf16.xpose.msra.mxu0 0
    %684 = vmatprep.subr.bf16.mxu0 0
    %685 = vmatpush1.bf16.xpose.msra.mxu0 0
    %686 = vmatprep.subr.bf16.mxu0 0
    %687 = vmatpush1.bf16.xpose.msra.mxu0 0
    %688 = vmatprep.subr.bf16.mxu0 0
    %689 = vmatpush1.bf16.xpose.msra.mxu0 0
    %690 = vmatprep.subr.bf16.mxu0 0
    %691 = vmatpush1.bf16.xpose.msra.mxu0 0
    %692 = vmatprep.subr.bf16.mxu0 0
    %693 = vmatpush1.bf16.xpose.msra.mxu0 0
    %694 = vmatprep.subr.bf16.mxu0 0
    %695 = vmatpush1.bf16.xpose.msra.mxu0 0
    %696 = vmatprep.subr.bf16.mxu0 0
    %697 = vmatpush1.bf16.xpose.msra.mxu0 0
    %698 = vmatprep.mubr.bf16.mxu0 0
    %699 = vmatmul.mubr.bf16.gmra.mrb[0].mxu0 %v661
    %v700 = vpop.f32.mrb[0].mxu0
    %v701 = vadd.f32 %v657, %v700
    %v702 = vpop.f32.mrb[0].mxu0
    %v703 = vpop.f32.mrb[0].mxu0
    %v704 = vpop.f32.mrb[0].mxu0
    %705 = vdwg.mxu0
    %v707 = vsel %vm659, %v642, 0
    %v710 = vsel %vm659, %v646, 0
    %712 = vmatprep.subr.bf16.mxu0 0
    %713 = vmatpush1.bf16.xpose.msra.mxu0 %v710
    %714 = vmatprep.subr.bf16.mxu0 0
    %715 = vmatpush1.bf16.xpose.msra.mxu0 0
    %716 = vmatprep.subr.bf16.mxu0 0
    %717 = vmatpush1.bf16.xpose.msra.mxu0 0
    %718 = vmatprep.subr.bf16.mxu0 0
    %719 = vmatpush1.bf16.xpose.msra.mxu0 0
    %720 = vmatprep.subr.bf16.mxu0 0
    %721 = vmatpush1.bf16.xpose.msra.mxu0 0
    %722 = vmatprep.subr.bf16.mxu0 0
    %723 = vmatpush1.bf16.xpose.msra.mxu0 0
    %724 = vmatprep.subr.bf16.mxu0 0
    %725 = vmatpush1.bf16.xpose.msra.mxu0 0
    %726 = vmatprep.subr.bf16.mxu0 0
    %727 = vmatpush1.bf16.xpose.msra.mxu0 0
    %728 = vmatprep.subr.bf16.mxu0 0
    %729 = vmatpush1.bf16.xpose.msra.mxu0 0
    %730 = vmatprep.subr.bf16.mxu0 0
    %731 = vmatpush1.bf16.xpose.msra.mxu0 0
    %732 = vmatprep.subr.bf16.mxu0 0
    %733 = vmatpush1.bf16.xpose.msra.mxu0 0
    %734 = vmatprep.subr.bf16.mxu0 0
    %735 = vmatpush1.bf16.xpose.msra.mxu0 0
    %736 = vmatprep.subr.bf16.mxu0 0
    %737 = vmatpush1.bf16.xpose.msra.mxu0 0
    %738 = vmatprep.subr.bf16.mxu0 0
    %739 = vmatpush1.bf16.xpose.msra.mxu0 0
    %740 = vmatprep.subr.bf16.mxu0 0
    %741 = vmatpush1.bf16.xpose.msra.mxu0 0
    %742 = vmatprep.subr.bf16.mxu0 0
    %743 = vmatpush1.bf16.xpose.msra.mxu0 0
    %744 = vmatprep.mubr.bf16.mxu0 0
    %745 = vmatmul.mubr.bf16.gmra.mrb[0].mxu0 %v707
    %v746 = vpop.f32.mrb[0].mxu0
    %v747 = vadd.f32 %v657, %v746
    %v748 = vpop.f32.mrb[0].mxu0
    %v749 = vpop.f32.mrb[0].mxu0
    %v750 = vpop.f32.mrb[0].mxu0
    %751 = vdwg.mxu0
    %v753 = vsel %vm659, %v643, 0
    %v756 = vsel %vm659, %v647, 0
    %758 = vmatprep.subr.bf16.mxu0 0
    %759 = vmatpush1.bf16.xpose.msra.mxu0 %v756
    %760 = vmatprep.subr.bf16.mxu0 0
    %761 = vmatpush1.bf16.xpose.msra.mxu0 0
    %762 = vmatprep.subr.bf16.mxu0 0
    %763 = vmatpush1.bf16.xpose.msra.mxu0 0
    %764 = vmatprep.subr.bf16.mxu0 0
    %765 = vmatpush1.bf16.xpose.msra.mxu0 0
    %766 = vmatprep.subr.bf16.mxu0 0
    %767 = vmatpush1.bf16.xpose.msra.mxu0 0
    %768 = vmatprep.subr.bf16.mxu0 0
    %769 = vmatpush1.bf16.xpose.msra.mxu0 0
    %770 = vmatprep.subr.bf16.mxu0 0
    %771 = vmatpush1.bf16.xpose.msra.mxu0 0
    %772 = vmatprep.subr.bf16.mxu0 0
    %773 = vmatpush1.bf16.xpose.msra.mxu0 0
    %774 = vmatprep.subr.bf16.mxu0 0
    %775 = vmatpush1.bf16.xpose.msra.mxu0 0
    %776 = vmatprep.subr.bf16.mxu0 0
    %777 = vmatpush1.bf16.xpose.msra.mxu0 0
    %778 = vmatprep.subr.bf16.mxu0 0
    %779 = vmatpush1.bf16.xpose.msra.mxu0 0
    %780 = vmatprep.subr.bf16.mxu0 0
    %781 = vmatpush1.bf16.xpose.msra.mxu0 0
    %782 = vmatprep.subr.bf16.mxu0 0
    %783 = vmatpush1.bf16.xpose.msra.mxu0 0
    %784 = vmatprep.subr.bf16.mxu0 0
    %785 = vmatpush1.bf16.xpose.msra.mxu0 0
    %786 = vmatprep.subr.bf16.mxu0 0
    %787 = vmatpush1.bf16.xpose.msra.mxu0 0
    %788 = vmatprep.subr.bf16.mxu0 0
    %789 = vmatpush1.bf16.xpose.msra.mxu0 0
    %790 = vmatprep.mubr.bf16.mxu0 0
    %791 = vmatmul.mubr.bf16.gmra.mrb[0].mxu0 %v753
    %v792 = vpop.f32.mrb[0].mxu0
    %v793 = vadd.f32 %v657, %v792
    %v794 = vpop.f32.mrb[0].mxu0
    %v795 = vpop.f32.mrb[0].mxu0
    %v796 = vpop.f32.mrb[0].mxu0
    %797 = vdwg.mxu0
    %v799 = vsel %vm659, %v644, 0
    %v802 = vsel %vm659, %v648, 0
    %804 = vmatprep.subr.bf16.mxu0 0
    %805 = vmatpush1.bf16.xpose.msra.mxu0 %v802
    %806 = vmatprep.subr.bf16.mxu0 0
    %807 = vmatpush1.bf16.xpose.msra.mxu0 0
    %808 = vmatprep.subr.bf16.mxu0 0
    %809 = vmatpush1.bf16.xpose.msra.mxu0 0
    %810 = vmatprep.subr.bf16.mxu0 0
    %811 = vmatpush1.bf16.xpose.msra.mxu0 0
    %812 = vmatprep.subr.bf16.mxu0 0
    %813 = vmatpush1.bf16.xpose.msra.mxu0 0
    %814 = vmatprep.subr.bf16.mxu0 0
    %815 = vmatpush1.bf16.xpose.msra.mxu0 0
    %816 = vmatprep.subr.bf16.mxu0 0
    %817 = vmatpush1.bf16.xpose.msra.mxu0 0
    %818 = vmatprep.subr.bf16.mxu0 0
    %819 = vmatpush1.bf16.xpose.msra.mxu0 0
    %820 = vmatprep.subr.bf16.mxu0 0
    %821 = vmatpush1.bf16.xpose.msra.mxu0 0
    %822 = vmatprep.subr.bf16.mxu0 0
    %823 = vmatpush1.bf16.xpose.msra.mxu0 0
    %824 = vmatprep.subr.bf16.mxu0 0
    %825 = vmatpush1.bf16.xpose.msra.mxu0 0
    %826 = vmatprep.subr.bf16.mxu0 0
    %827 = vmatpush1.bf16.xpose.msra.mxu0 0
    %828 = vmatprep.subr.bf16.mxu0 0
    %829 = vmatpush1.bf16.xpose.msra.mxu0 0
    %830 = vmatprep.subr.bf16.mxu0 0
    %831 = vmatpush1.bf16.xpose.msra.mxu0 0
    %832 = vmatprep.subr.bf16.mxu0 0
    %833 = vmatpush1.bf16.xpose.msra.mxu0 0
    %834 = vmatprep.subr.bf16.mxu0 0
    %835 = vmatpush1.bf16.xpose.msra.mxu0 0
    %836 = vmatprep.mubr.bf16.mxu0 0
    %837 = vmatmul.mubr.bf16.gmra.mrb[0].mxu0 %v799
    %v838 = vpop.f32.mrb[0].mxu0
    %v839 = vadd.f32 %v657, %v838
    %v840 = vpop.f32.mrb[0].mxu0
    %v841 = vpop.f32.mrb[0].mxu0
    %v842 = vpop.f32.mrb[0].mxu0
    %843 = vdwg.mxu0
    %v844 = vsel %vm659, %v701, -inf
    %845 = vmax.xlane.f32.xlu0 %v844
    %v846 = vpop.xlane.xlu0 %845
    %v847 = vsel %vm659, %v747, -inf
    %848 = vmax.xlane.f32.xlu0 %v847
    %v849 = vpop.xlane.xlu0 %848
    %v850 = vsel %vm659, %v793, -inf
    %851 = vmax.xlane.f32.xlu0 %v850
    %v852 = vpop.xlane.xlu0 %851
    %v853 = vsel %vm659, %v839, -inf
    %854 = vmax.xlane.f32.xlu0 %v853
    %v855 = vpop.xlane.xlu0 %854
    %v856 = vsub.f32 %v701, %v846
    %v857 = vsub.f32 %v747, %v849
    %v858 = vsub.f32 %v793, %v852
    %v859 = vsub.f32 %v839, %v855
    %v860 = vmul.f32 %v856, 1.442695
    %v861 = vpow.pop %v860
    %v862 = vmul.f32 %v857, 1.442695
    %v863 = vpow.pop %v862
    %v864 = vmul.f32 %v858, 1.442695
    %v865 = vpow.pop %v864
    %v866 = vmul.f32 %v859, 1.442695
    %v867 = vpow.pop %v866
    %v868 = vsel %vm659, %v861, 0.0
    %869 = vadd.xlane.f32.xlu0 %v868
    %v870 = vpop.xlane.xlu0 %869
    %v871 = vsel %vm659, %v863, 0.0
    %872 = vadd.xlane.f32.xlu0 %v871
    %v873 = vpop.xlane.xlu0 %872
    %v874 = vsel %vm659, %v865, 0.0
    %875 = vadd.xlane.f32.xlu0 %v874
    %v876 = vpop.xlane.xlu0 %875
    %v877 = vsel %vm659, %v867, 0.0
    %878 = vadd.xlane.f32.xlu0 %v877
    %v879 = vpop.xlane.xlu0 %878
    %v880 = vrcp.pop %v870
    %v881 = vrcp.pop %v873
    %v882 = vrcp.pop %v876
    %v883 = vrcp.pop %v879
    %v884 = vmul.f32 %v861, %v880
    %v885 = vmul.f32 %v863, %v881
    %v886 = vmul.f32 %v865, %v882
    %v887 = vmul.f32 %v867, %v883
    %v888 = vpack.c.bf16 %v884, %v884
    %v889 = vpack.c.bf16 %v885, %v885
    %v890 = vpack.c.bf16 %v886, %v886
    %v891 = vpack.c.bf16 %v887, %v887
    %v893 = vsel %vm659, %v888, 0
    %vm895 = vcmask 1043456
    %v897 = vsel %vm895, %v649, 0
    %899 = vmatprep.subr.bf16.mxu0 0
    %900 = vmatpush1.bf16.msra.mxu0 %v897
    %901 = vmatprep.subr.bf16.mxu0 0
    %902 = vmatpush1.bf16.msra.mxu0 0
    %903 = vmatprep.subr.bf16.mxu0 0
    %904 = vmatpush1.bf16.msra.mxu0 0
    %905 = vmatprep.subr.bf16.mxu0 0
    %906 = vmatpush1.bf16.msra.mxu0 0
    %907 = vmatprep.subr.bf16.mxu0 0
    %908 = vmatpush1.bf16.msra.mxu0 0
    %909 = vmatprep.subr.bf16.mxu0 0
    %910 = vmatpush1.bf16.msra.mxu0 0
    %911 = vmatprep.subr.bf16.mxu0 0
    %912 = vmatpush1.bf16.msra.mxu0 0
    %913 = vmatprep.subr.bf16.mxu0 0
    %914 = vmatpush1.bf16.msra.mxu0 0
    %915 = vmatprep.subr.bf16.mxu0 0
    %916 = vmatpush1.bf16.msra.mxu0 0
    %917 = vmatprep.subr.bf16.mxu0 0
    %918 = vmatpush1.bf16.msra.mxu0 0
    %919 = vmatprep.subr.bf16.mxu0 0
    %920 = vmatpush1.bf16.msra.mxu0 0
    %921 = vmatprep.subr.bf16.mxu0 0
    %922 = vmatpush1.bf16.msra.mxu0 0
    %923 = vmatprep.subr.bf16.mxu0 0
    %924 = vmatpush1.bf16.msra.mxu0 0
    %925 = vmatprep.subr.bf16.mxu0 0
    %926 = vmatpush1.bf16.msra.mxu0 0
    %927 = vmatprep.subr.bf16.mxu0 0
    %928 = vmatpush1.bf16.msra.mxu0 0
    %929 = vmatprep.subr.bf16.mxu0 0
    %930 = vmatpush1.bf16.msra.mxu0 0
    %931 = vmatprep.mubr.bf16.mxu0 0
    %932 = vmatmul.mubr.bf16.gmra.mrb[0].mxu0 %v893
    %v933 = vpop.f32.mrb[0].mxu0
    %v934 = vadd.f32 0.0, %v933
    %v935 = vpop.f32.mrb[0].mxu0
    %v936 = vpop.f32.mrb[0].mxu0
    %v937 = vpop.f32.mrb[0].mxu0
    %938 = vdwg.mxu0
    %v940 = vsel %vm659, %v889, 0
    %v943 = vsel %vm895, %v650, 0
    %945 = vmatprep.subr.bf16.mxu0 0
    %946 = vmatpush1.bf16.msra.mxu0 %v943
    %947 = vmatprep.subr.bf16.mxu0 0
    %948 = vmatpush1.bf16.msra.mxu0 0
    %949 = vmatprep.subr.bf16.mxu0 0
    %950 = vmatpush1.bf16.msra.mxu0 0
    %951 = vmatprep.subr.bf16.mxu0 0
    %952 = vmatpush1.bf16.msra.mxu0 0
    %953 = vmatprep.subr.bf16.mxu0 0
    %954 = vmatpush1.bf16.msra.mxu0 0
    %955 = vmatprep.subr.bf16.mxu0 0
    %956 = vmatpush1.bf16.msra.mxu0 0
    %957 = vmatprep.subr.bf16.mxu0 0
    %958 = vmatpush1.bf16.msra.mxu0 0
    %959 = vmatprep.subr.bf16.mxu0 0
    %960 = vmatpush1.bf16.msra.mxu0 0
    %961 = vmatprep.subr.bf16.mxu0 0
    %962 = vmatpush1.bf16.msra.mxu0 0
    %963 = vmatprep.subr.bf16.mxu0 0
    %964 = vmatpush1.bf16.msra.mxu0 0
    %965 = vmatprep.subr.bf16.mxu0 0
    %966 = vmatpush1.bf16.msra.mxu0 0
    %967 = vmatprep.subr.bf16.mxu0 0
    %968 = vmatpush1.bf16.msra.mxu0 0
    %969 = vmatprep.subr.bf16.mxu0 0
    %970 = vmatpush1.bf16.msra.mxu0 0
    %971 = vmatprep.subr.bf16.mxu0 0
    %972 = vmatpush1.bf16.msra.mxu0 0
    %973 = vmatprep.subr.bf16.mxu0 0
    %974 = vmatpush1.bf16.msra.mxu0 0
    %975 = vmatprep.subr.bf16.mxu0 0
    %976 = vmatpush1.bf16.msra.mxu0 0
    %977 = vmatprep.mubr.bf16.mxu0 0
    %978 = vmatmul.mubr.bf16.gmra.mrb[0].mxu0 %v940
    %v979 = vpop.f32.mrb[0].mxu0
    %v980 = vadd.f32 0.0, %v979
    %v981 = vpop.f32.mrb[0].mxu0
    %v982 = vpop.f32.mrb[0].mxu0
    %v983 = vpop.f32.mrb[0].mxu0
    %984 = vdwg.mxu0
    %v986 = vsel %vm659, %v890, 0
    %v989 = vsel %vm895, %v651, 0
    %991 = vmatprep.subr.bf16.mxu0 0
    %992 = vmatpush1.bf16.msra.mxu0 %v989
    %993 = vmatprep.subr.bf16.mxu0 0
    %994 = vmatpush1.bf16.msra.mxu0 0
    %995 = vmatprep.subr.bf16.mxu0 0
    %996 = vmatpush1.bf16.msra.mxu0 0
    %997 = vmatprep.subr.bf16.mxu0 0
    %998 = vmatpush1.bf16.msra.mxu0 0
    %999 = vmatprep.subr.bf16.mxu0 0
    %1000 = vmatpush1.bf16.msra.mxu0 0
    %1001 = vmatprep.subr.bf16.mxu0 0
    %1002 = vmatpush1.bf16.msra.mxu0 0
    %1003 = vmatprep.subr.bf16.mxu0 0
    %1004 = vmatpush1.bf16.msra.mxu0 0
    %1005 = vmatprep.subr.bf16.mxu0 0
    %1006 = vmatpush1.bf16.msra.mxu0 0
    %1007 = vmatprep.subr.bf16.mxu0 0
    %1008 = vmatpush1.bf16.msra.mxu0 0
    %1009 = vmatprep.subr.bf16.mxu0 0
    %1010 = vmatpush1.bf16.msra.mxu0 0
    %1011 = vmatprep.subr.bf16.mxu0 0
    %1012 = vmatpush1.bf16.msra.mxu0 0
    %1013 = vmatprep.subr.bf16.mxu0 0
    %1014 = vmatpush1.bf16.msra.mxu0 0
    %1015 = vmatprep.subr.bf16.mxu0 0
    %1016 = vmatpush1.bf16.msra.mxu0 0
    %1017 = vmatprep.subr.bf16.mxu0 0
    %1018 = vmatpush1.bf16.msra.mxu0 0
    %1019 = vmatprep.subr.bf16.mxu0 0
    %1020 = vmatpush1.bf16.msra.mxu0 0
    %1021 = vmatprep.subr.bf16.mxu0 0
    %1022 = vmatpush1.bf16.msra.mxu0 0
    %1023 = vmatprep.mubr.bf16.mxu0 0
    %1024 = vmatmul.mubr.bf16.gmra.mrb[0].mxu0 %v986
    %v1025 = vpop.f32.mrb[0].mxu0
    %v1026 = vadd.f32 0.0, %v1025
    %v1027 = vpop.f32.mrb[0].mxu0
    %v1028 = vpop.f32.mrb[0].mxu0
    %v1029 = vpop.f32.mrb[0].mxu0
    %1030 = vdwg.mxu0
    %v1032 = vsel %vm659, %v891, 0
    %v1035 = vsel %vm895, %v652, 0
    %1037 = vmatprep.subr.bf16.mxu0 0
    %1038 = vmatpush1.bf16.msra.mxu0 %v1035
    %1039 = vmatprep.subr.bf16.mxu0 0
    %1040 = vmatpush1.bf16.msra.mxu0 0
    %1041 = vmatprep.subr.bf16.mxu0 0
    %1042 = vmatpush1.bf16.msra.mxu0 0
    %1043 = vmatprep.subr.bf16.mxu0 0
    %1044 = vmatpush1.bf16.msra.mxu0 0
    %1045 = vmatprep.subr.bf16.mxu0 0
    %1046 = vmatpush1.bf16.msra.mxu0 0
    %1047 = vmatprep.subr.bf16.mxu0 0
    %1048 = vmatpush1.bf16.msra.mxu0 0
    %1049 = vmatprep.subr.bf16.mxu0 0
    %1050 = vmatpush1.bf16.msra.mxu0 0
    %1051 = vmatprep.subr.bf16.mxu0 0
    %1052 = vmatpush1.bf16.msra.mxu0 0
    %1053 = vmatprep.subr.bf16.mxu0 0
    %1054 = vmatpush1.bf16.msra.mxu0 0
    %1055 = vmatprep.subr.bf16.mxu0 0
    %1056 = vmatpush1.bf16.msra.mxu0 0
    %1057 = vmatprep.subr.bf16.mxu0 0
    %1058 = vmatpush1.bf16.msra.mxu0 0
    %1059 = vmatprep.subr.bf16.mxu0 0
    %1060 = vmatpush1.bf16.msra.mxu0 0
    %1061 = vmatprep.subr.bf16.mxu0 0
    %1062 = vmatpush1.bf16.msra.mxu0 0
    %1063 = vmatprep.subr.bf16.mxu0 0
    %1064 = vmatpush1.bf16.msra.mxu0 0
    %1065 = vmatprep.subr.bf16.mxu0 0
    %1066 = vmatpush1.bf16.msra.mxu0 0
    %1067 = vmatprep.subr.bf16.mxu0 0
    %1068 = vmatpush1.bf16.msra.mxu0 0
    %1069 = vmatprep.mubr.bf16.mxu0 0
    %1070 = vmatmul.mubr.bf16.gmra.mrb[0].mxu0 %v1032
    %v1071 = vpop.f32.mrb[0].mxu0
    %v1072 = vadd.f32 0.0, %v1071
    %v1073 = vpop.f32.mrb[0].mxu0
    %v1074 = vpop.f32.mrb[0].mxu0
    %v1075 = vpop.f32.mrb[0].mxu0
    %1076 = vdwg.mxu0
    %v1077 = vpack.c.bf16 %v934, %v934
    %1078 = vst.msk [vmem:[#allocation5] sm:$0xf] %vm581, %v1077
    %v1079 = vpack.c.bf16 %v980, %v980
    %1081 = vrot.lane.b32.xlu0 %v1079, 8
    %v1082 = vpop.permute.xlu0 %1081
    %vm1084 = vcmask 126016
    %1085 = vst.msk [vmem:[#allocation5] sm:$0xf] %vm1084, %v1082
    %v1086 = vpack.c.bf16 %v1026, %v1026
    %1088 = vrot.lane.b32.xlu0 %v1086, 16
    %v1089 = vpop.permute.xlu0 %1088
    %vm1091 = vcmask 191616
    %1092 = vst.msk [vmem:[#allocation5] sm:$0xf] %vm1091, %v1089
    %v1093 = vpack.c.bf16 %v1072, %v1072
    %1095 = vrot.lane.b32.xlu0 %v1093, 24
    %v1096 = vpop.permute.xlu0 %1095
    %vm1098 = vcmask 257216
    %1099 = vst.msk [vmem:[#allocation5] sm:$0xf] %vm1098, %v1096
    %v1100 = vpack.c.bf16 %v579, %v579
    %1101 = vst.msk [vmem:[#allocation2] sm:$0xf] %vm581, %v1100
    %v1102 = vpack.c.bf16 %v511, %v511
    %1103 = vst.msk [vmem:[#allocation3] sm:$0xf] %vm581, %v1102
    %v1104 = vpack.c.bf16 %v575, %v575
    %1105 = vst.msk [vmem:[#allocation4] sm:$0xf] %vm581, %v1104
    %v1107 = vunpack.c.l.b16 %v1100
    %v1108 = vpack.c.b16 %v1107, %v1107
    %1109 = vrot.lane.b32.xlu0 %v1108, 120
    %v1110 = vpop.permute.xlu0 %1109
    %1112 = vst.msk [vmem:[%s593] sm:$0xf] %vm581, %v1110
    %v1114 = vunpack.c.l.b16 %v1102
    %v1115 = vpack.c.b16 %v1114, %v1114
    %1116 = vrot.lane.b32.xlu0 %v1115, 120
    %v1117 = vpop.permute.xlu0 %1116
    %1119 = vst.msk [vmem:[%s601] sm:$0xf] %vm581, %v1117
    %v1121 = vunpack.c.l.b16 %v1104
    %v1122 = vpack.c.b16 %v1121, %v1121
    %1123 = vrot.lane.b32.xlu0 %v1122, 120
    %v1124 = vpop.permute.xlu0 %1123
    %1126 = vst.msk [vmem:[%s609] sm:$0xf] %vm581, %v1124
    %1127 = vrot.lane.b32.xlu0 %v1108, 112
    %v1128 = vpop.permute.xlu0 %1127
    %1130 = vst.msk [vmem:[%s614] sm:$0xf] %vm581, %v1128
    %1131 = vrot.lane.b32.xlu0 %v1115, 112
    %v1132 = vpop.permute.xlu0 %1131
    %1134 = vst.msk [vmem:[%s619] sm:$0xf] %vm581, %v1132
    %1135 = vrot.lane.b32.xlu0 %v1122, 112
    %v1136 = vpop.permute.xlu0 %1135
    %1138 = vst.msk [vmem:[%s624] sm:$0xf] %vm581, %v1136
    %1139 = vrot.lane.b32.xlu0 %v1108, 104
    %v1140 = vpop.permute.xlu0 %1139
    %1142 = vst.msk [vmem:[%s629] sm:$0xf] %vm581, %v1140
    %1143 = vrot.lane.b32.xlu0 %v1115, 104
    %v1144 = vpop.permute.xlu0 %1143
    %1146 = vst.msk [vmem:[%s634] sm:$0xf] %vm581, %v1144
    %1147 = vrot.lane.b32.xlu0 %v1122, 104
    %v1148 = vpop.permute.xlu0 %1147
    %1150 = vst.msk [vmem:[%s639] sm:$0xf] %vm581, %v1148
    %v1151 = vld [vmem:[#allocation2] sm:$0xf]
    %v1152 = vld [vmem:[#allocation2 + $0x4] sm:$0xf]
    %v1153 = vld [vmem:[#allocation2 + $0x8] sm:$0xf]
    %v1154 = vld [vmem:[#allocation2 + $0xc] sm:$0xf]
    %v1155 = vld [vmem:[#allocation3] sm:$0xf]
    %v1156 = vld [vmem:[#allocation3 + $0x4] sm:$0xf]
    %v1157 = vld [vmem:[#allocation3 + $0x8] sm:$0xf]
    %v1158 = vld [vmem:[#allocation3 + $0xc] sm:$0xf]
    %v1159 = vld [vmem:[#allocation4] sm:$0xf]
    %v1160 = vld [vmem:[#allocation4 + $0x4] sm:$0xf]
    %v1161 = vld [vmem:[#allocation4 + $0x8] sm:$0xf]
    %v1162 = vld [vmem:[#allocation4 + $0xc] sm:$0xf]
    %v1164 = vlaneseq
    %v1165 = vshrl.u32 %v1164, 7
    %v1166 = vsub.s32 0, %v1165
    %v1167 = vrot.slane %v321, %v1166
    %v1170 = vsel %vm659, %v1151, 0
    %v1173 = vsel %vm659, %v1155, 0
    %1175 = vmatprep.subr.bf16.mxu0 0
    %1176 = vmatpush1.bf16.xpose.msra.mxu0 %v1173
    %1177 = vmatprep.subr.bf16.mxu0 0
    %1178 = vmatpush1.bf16.xpose.msra.mxu0 0
    %1179 = vmatprep.subr.bf16.mxu0 0
    %1180 = vmatpush1.bf16.xpose.msra.mxu0 0
    %1181 = vmatprep.subr.bf16.mxu0 0
    %1182 = vmatpush1.bf16.xpose.msra.mxu0 0
    %1183 = vmatprep.subr.bf16.mxu0 0
    %1184 = vmatpush1.bf16.xpose.msra.mxu0 0
    %1185 = vmatprep.subr.bf16.mxu0 0
    %1186 = vmatpush1.bf16.xpose.msra.mxu0 0
    %1187 = vmatprep.subr.bf16.mxu0 0
    %1188 = vmatpush1.bf16.xpose.msra.mxu0 0
    %1189 = vmatprep.subr.bf16.mxu0 0
    %1190 = vmatpush1.bf16.xpose.msra.mxu0 0
    %1191 = vmatprep.subr.bf16.mxu0 0
    %1192 = vmatpush1.bf16.xpose.msra.mxu0 0
    %1193 = vmatprep.subr.bf16.mxu0 0
    %1194 = vmatpush1.bf16.xpose.msra.mxu0 0
    %1195 = vmatprep.subr.bf16.mxu0 0
    %1196 = vmatpush1.bf16.xpose.msra.mxu0 0
    %1197 = vmatprep.subr.bf16.mxu0 0
    %1198 = vmatpush1.bf16.xpose.msra.mxu0 0
    %1199 = vmatprep.subr.bf16.mxu0 0
    %1200 = vmatpush1.bf16.xpose.msra.mxu0 0
    %1201 = vmatprep.subr.bf16.mxu0 0
    %1202 = vmatpush1.bf16.xpose.msra.mxu0 0
    %1203 = vmatprep.subr.bf16.mxu0 0
    %1204 = vmatpush1.bf16.xpose.msra.mxu0 0
    %1205 = vmatprep.subr.bf16.mxu0 0
    %1206 = vmatpush1.bf16.xpose.msra.mxu0 0
    %1207 = vmatprep.mubr.bf16.mxu0 0
    %1208 = vmatmul.mubr.bf16.gmra.mrb[0].mxu0 %v1170
    %v1209 = vpop.f32.mrb[0].mxu0
    %v1210 = vadd.f32 %v1167, %v1209
    %v1211 = vpop.f32.mrb[0].mxu0
    %v1212 = vpop.f32.mrb[0].mxu0
    %v1213 = vpop.f32.mrb[0].mxu0
    %1214 = vdwg.mxu0
    %v1216 = vsel %vm659, %v1152, 0
    %v1219 = vsel %vm659, %v1156, 0
    %1221 = vmatprep.subr.bf16.mxu0 0
    %1222 = vmatpush1.bf16.xpose.msra.mxu0 %v1219
    %1223 = vmatprep.subr.bf16.mxu0 0
    %1224 = vmatpush1.bf16.xpose.msra.mxu0 0
    %1225 = vmatprep.subr.bf16.mxu0 0
    %1226 = vmatpush1.bf16.xpose.msra.mxu0 0
    %1227 = vmatprep.subr.bf16.mxu0 0
    %1228 = vmatpush1.bf16.xpose.msra.mxu0 0
    %1229 = vmatprep.subr.bf16.mxu0 0
    %1230 = vmatpush1.bf16.xpose.msra.mxu0 0
    %1231 = vmatprep.subr.bf16.mxu0 0
    %1232 = vmatpush1.bf16.xpose.msra.mxu0 0
    %1233 = vmatprep.subr.bf16.mxu0 0
    %1234 = vmatpush1.bf16.xpose.msra.mxu0 0
    %1235 = vmatprep.subr.bf16.mxu0 0
    %1236 = vmatpush1.bf16.xpose.msra.mxu0 0
    %1237 = vmatprep.subr.bf16.mxu0 0
    %1238 = vmatpush1.bf16.xpose.msra.mxu0 0
    %1239 = vmatprep.subr.bf16.mxu0 0
    %1240 = vmatpush1.bf16.xpose.msra.mxu0 0
    %1241 = vmatprep.subr.bf16.mxu0 0
    %1242 = vmatpush1.bf16.xpose.msra.mxu0 0
    %1243 = vmatprep.subr.bf16.mxu0 0
    %1244 = vmatpush1.bf16.xpose.msra.mxu0 0
    %1245 = vmatprep.subr.bf16.mxu0 0
    %1246 = vmatpush1.bf16.xpose.msra.mxu0 0
    %1247 = vmatprep.subr.bf16.mxu0 0
    %1248 = vmatpush1.bf16.xpose.msra.mxu0 0
    %1249 = vmatprep.subr.bf16.mxu0 0
    %1250 = vmatpush1.bf16.xpose.msra.mxu0 0
    %1251 = vmatprep.subr.bf16.mxu0 0
    %1252 = vmatpush1.bf16.xpose.msra.mxu0 0
    %1253 = vmatprep.mubr.bf16.mxu0 0
    %1254 = vmatmul.mubr.bf16.gmra.mrb[0].mxu0 %v1216
    %v1255 = vpop.f32.mrb[0].mxu0
    %v1256 = vadd.f32 %v1167, %v1255
    %v1257 = vpop.f32.mrb[0].mxu0
    %v1258 = vpop.f32.mrb[0].mxu0
    %v1259 = vpop.f32.mrb[0].mxu0
    %1260 = vdwg.mxu0
    %v1262 = vsel %vm659, %v1153, 0
    %v1265 = vsel %vm659, %v1157, 0
    %1267 = vmatprep.subr.bf16.mxu0 0
    %1268 = vmatpush1.bf16.xpose.msra.mxu0 %v1265
    %1269 = vmatprep.subr.bf16.mxu0 0
    %1270 = vmatpush1.bf16.xpose.msra.mxu0 0
    %1271 = vmatprep.subr.bf16.mxu0 0
    %1272 = vmatpush1.bf16.xpose.msra.mxu0 0
    %1273 = vmatprep.subr.bf16.mxu0 0
    %1274 = vmatpush1.bf16.xpose.msra.mxu0 0
    %1275 = vmatprep.subr.bf16.mxu0 0
    %1276 = vmatpush1.bf16.xpose.msra.mxu0 0
    %1277 = vmatprep.subr.bf16.mxu0 0
    %1278 = vmatpush1.bf16.xpose.msra.mxu0 0
    %1279 = vmatprep.subr.bf16.mxu0 0
    %1280 = vmatpush1.bf16.xpose.msra.mxu0 0
    %1281 = vmatprep.subr.bf16.mxu0 0
    %1282 = vmatpush1.bf16.xpose.msra.mxu0 0
    %1283 = vmatprep.subr.bf16.mxu0 0
    %1284 = vmatpush1.bf16.xpose.msra.mxu0 0
    %1285 = vmatprep.subr.bf16.mxu0 0
    %1286 = vmatpush1.bf16.xpose.msra.mxu0 0
    %1287 = vmatprep.subr.bf16.mxu0 0
    %1288 = vmatpush1.bf16.xpose.msra.mxu0 0
    %1289 = vmatprep.subr.bf16.mxu0 0
    %1290 = vmatpush1.bf16.xpose.msra.mxu0 0
    %1291 = vmatprep.subr.bf16.mxu0 0
    %1292 = vmatpush1.bf16.xpose.msra.mxu0 0
    %1293 = vmatprep.subr.bf16.mxu0 0
    %1294 = vmatpush1.bf16.xpose.msra.mxu0 0
    %1295 = vmatprep.subr.bf16.mxu0 0
    %1296 = vmatpush1.bf16.xpose.msra.mxu0 0
    %1297 = vmatprep.subr.bf16.mxu0 0
    %1298 = vmatpush1.bf16.xpose.msra.mxu0 0
    %1299 = vmatprep.mubr.bf16.mxu0 0
    %1300 = vmatmul.mubr.bf16.gmra.mrb[0].mxu0 %v1262
    %v1301 = vpop.f32.mrb[0].mxu0
    %v1302 = vadd.f32 %v1167, %v1301
    %v1303 = vpop.f32.mrb[0].mxu0
    %v1304 = vpop.f32.mrb[0].mxu0
    %v1305 = vpop.f32.mrb[0].mxu0
    %1306 = vdwg.mxu0
    %v1308 = vsel %vm659, %v1154, 0
    %v1311 = vsel %vm659, %v1158, 0
    %1313 = vmatprep.subr.bf16.mxu0 0
    %1314 = vmatpush1.bf16.xpose.msra.mxu0 %v1311
    %1315 = vmatprep.subr.bf16.mxu0 0
    %1316 = vmatpush1.bf16.xpose.msra.mxu0 0
    %1317 = vmatprep.subr.bf16.mxu0 0
    %1318 = vmatpush1.bf16.xpose.msra.mxu0 0
    %1319 = vmatprep.subr.bf16.mxu0 0
    %1320 = vmatpush1.bf16.xpose.msra.mxu0 0
    %1321 = vmatprep.subr.bf16.mxu0 0
    %1322 = vmatpush1.bf16.xpose.msra.mxu0 0
    %1323 = vmatprep.subr.bf16.mxu0 0
    %1324 = vmatpush1.bf16.xpose.msra.mxu0 0
    %1325 = vmatprep.subr.bf16.mxu0 0
    %1326 = vmatpush1.bf16.xpose.msra.mxu0 0
    %1327 = vmatprep.subr.bf16.mxu0 0
    %1328 = vmatpush1.bf16.xpose.msra.mxu0 0
    %1329 = vmatprep.subr.bf16.mxu0 0
    %1330 = vmatpush1.bf16.xpose.msra.mxu0 0
    %1331 = vmatprep.subr.bf16.mxu0 0
    %1332 = vmatpush1.bf16.xpose.msra.mxu0 0
    %1333 = vmatprep.subr.bf16.mxu0 0
    %1334 = vmatpush1.bf16.xpose.msra.mxu0 0
    %1335 = vmatprep.subr.bf16.mxu0 0
    %1336 = vmatpush1.bf16.xpose.msra.mxu0 0
    %1337 = vmatprep.subr.bf16.mxu0 0
    %1338 = vmatpush1.bf16.xpose.msra.mxu0 0
    %1339 = vmatprep.subr.bf16.mxu0 0
    %1340 = vmatpush1.bf16.xpose.msra.mxu0 0
    %1341 = vmatprep.subr.bf16.mxu0 0
    %1342 = vmatpush1.bf16.xpose.msra.mxu0 0
    %1343 = vmatprep.subr.bf16.mxu0 0
    %1344 = vmatpush1.bf16.xpose.msra.mxu0 0
    %1345 = vmatprep.mubr.bf16.mxu0 0
    %1346 = vmatmul.mubr.bf16.gmra.mrb[0].mxu0 %v1308
    %v1347 = vpop.f32.mrb[0].mxu0
    %v1348 = vadd.f32 %v1167, %v1347
    %v1349 = vpop.f32.mrb[0].mxu0
    %v1350 = vpop.f32.mrb[0].mxu0
    %v1351 = vpop.f32.mrb[0].mxu0
    %1352 = vdwg.mxu0
    %v1353 = vsel %vm659, %v1210, -inf
    %1354 = vmax.xlane.f32.xlu0 %v1353
    %v1355 = vpop.xlane.xlu0 %1354
    %v1356 = vsel %vm659, %v1256, -inf
    %1357 = vmax.xlane.f32.xlu0 %v1356
    %v1358 = vpop.xlane.xlu0 %1357
    %v1359 = vsel %vm659, %v1302, -inf
    %1360 = vmax.xlane.f32.xlu0 %v1359
    %v1361 = vpop.xlane.xlu0 %1360
    %v1362 = vsel %vm659, %v1348, -inf
    %1363 = vmax.xlane.f32.xlu0 %v1362
    %v1364 = vpop.xlane.xlu0 %1363
    %v1365 = vsub.f32 %v1210, %v1355
    %v1366 = vsub.f32 %v1256, %v1358
    %v1367 = vsub.f32 %v1302, %v1361
    %v1368 = vsub.f32 %v1348, %v1364
    %v1369 = vmul.f32 %v1365, 1.442695
    %v1370 = vpow.pop %v1369
    %v1371 = vmul.f32 %v1366, 1.442695
    %v1372 = vpow.pop %v1371
    %v1373 = vmul.f32 %v1367, 1.442695
    %v1374 = vpow.pop %v1373
    %v1375 = vmul.f32 %v1368, 1.442695
    %v1376 = vpow.pop %v1375
    %v1377 = vsel %vm659, %v1370, 0.0
    %1378 = vadd.xlane.f32.xlu0 %v1377
    %v1379 = vpop.xlane.xlu0 %1378
    %v1380 = vsel %vm659, %v1372, 0.0
    %1381 = vadd.xlane.f32.xlu0 %v1380
    %v1382 = vpop.xlane.xlu0 %1381
    %v1383 = vsel %vm659, %v1374, 0.0
    %1384 = vadd.xlane.f32.xlu0 %v1383
    %v1385 = vpop.xlane.xlu0 %1384
    %v1386 = vsel %vm659, %v1376, 0.0
    %1387 = vadd.xlane.f32.xlu0 %v1386
    %v1388 = vpop.xlane.xlu0 %1387
    %v1389 = vrcp.pop %v1379
    %v1390 = vrcp.pop %v1382
    %v1391 = vrcp.pop %v1385
    %v1392 = vrcp.pop %v1388
    %v1393 = vmul.f32 %v1370, %v1389
    %v1394 = vmul.f32 %v1372, %v1390
    %v1395 = vmul.f32 %v1374, %v1391
    %v1396 = vmul.f32 %v1376, %v1392
    %v1397 = vpack.c.bf16 %v1393, %v1393
    %v1398 = vpack.c.bf16 %v1394, %v1394
    %v1399 = vpack.c.bf16 %v1395, %v1395
    %v1400 = vpack.c.bf16 %v1396, %v1396
    %v1402 = vsel %vm659, %v1397, 0
    %v1405 = vsel %vm895, %v1159, 0
    %1407 = vmatprep.subr.bf16.mxu0 0
    %1408 = vmatpush1.bf16.msra.mxu0 %v1405
    %1409 = vmatprep.subr.bf16.mxu0 0
    %1410 = vmatpush1.bf16.msra.mxu0 0
    %1411 = vmatprep.subr.bf16.mxu0 0
    %1412 = vmatpush1.bf16.msra.mxu0 0
    %1413 = vmatprep.subr.bf16.mxu0 0
    %1414 = vmatpush1.bf16.msra.mxu0 0
    %1415 = vmatprep.subr.bf16.mxu0 0
    %1416 = vmatpush1.bf16.msra.mxu0 0
    %1417 = vmatprep.subr.bf16.mxu0 0
    %1418 = vmatpush1.bf16.msra.mxu0 0
    %1419 = vmatprep.subr.bf16.mxu0 0
    %1420 = vmatpush1.bf16.msra.mxu0 0
    %1421 = vmatprep.subr.bf16.mxu0 0
    %1422 = vmatpush1.bf16.msra.mxu0 0
    %1423 = vmatprep.subr.bf16.mxu0 0
    %1424 = vmatpush1.bf16.msra.mxu0 0
    %1425 = vmatprep.subr.bf16.mxu0 0
    %1426 = vmatpush1.bf16.msra.mxu0 0
    %1427 = vmatprep.subr.bf16.mxu0 0
    %1428 = vmatpush1.bf16.msra.mxu0 0
    %1429 = vmatprep.subr.bf16.mxu0 0
    %1430 = vmatpush1.bf16.msra.mxu0 0
    %1431 = vmatprep.subr.bf16.mxu0 0
    %1432 = vmatpush1.bf16.msra.mxu0 0
    %1433 = vmatprep.subr.bf16.mxu0 0
    %1434 = vmatpush1.bf16.msra.mxu0 0
    %1435 = vmatprep.subr.bf16.mxu0 0
    %1436 = vmatpush1.bf16.msra.mxu0 0
    %1437 = vmatprep.subr.bf16.mxu0 0
    %1438 = vmatpush1.bf16.msra.mxu0 0
    %1439 = vmatprep.mubr.bf16.mxu0 0
    %1440 = vmatmul.mubr.bf16.gmra.mrb[0].mxu0 %v1402
    %v1441 = vpop.f32.mrb[0].mxu0
    %v1442 = vadd.f32 0.0, %v1441
    %v1443 = vpop.f32.mrb[0].mxu0
    %v1444 = vpop.f32.mrb[0].mxu0
    %v1445 = vpop.f32.mrb[0].mxu0
    %1446 = vdwg.mxu0
    %v1448 = vsel %vm659, %v1398, 0
    %v1451 = vsel %vm895, %v1160, 0
    %1453 = vmatprep.subr.bf16.mxu0 0
    %1454 = vmatpush1.bf16.msra.mxu0 %v1451
    %1455 = vmatprep.subr.bf16.mxu0 0
    %1456 = vmatpush1.bf16.msra.mxu0 0
    %1457 = vmatprep.subr.bf16.mxu0 0
    %1458 = vmatpush1.bf16.msra.mxu0 0
    %1459 = vmatprep.subr.bf16.mxu0 0
    %1460 = vmatpush1.bf16.msra.mxu0 0
    %1461 = vmatprep.subr.bf16.mxu0 0
    %1462 = vmatpush1.bf16.msra.mxu0 0
    %1463 = vmatprep.subr.bf16.mxu0 0
    %1464 = vmatpush1.bf16.msra.mxu0 0
    %1465 = vmatprep.subr.bf16.mxu0 0
    %1466 = vmatpush1.bf16.msra.mxu0 0
    %1467 = vmatprep.subr.bf16.mxu0 0
    %1468 = vmatpush1.bf16.msra.mxu0 0
    %1469 = vmatprep.subr.bf16.mxu0 0
    %1470 = vmatpush1.bf16.msra.mxu0 0
    %1471 = vmatprep.subr.bf16.mxu0 0
    %1472 = vmatpush1.bf16.msra.mxu0 0
    %1473 = vmatprep.subr.bf16.mxu0 0
    %1474 = vmatpush1.bf16.msra.mxu0 0
    %1475 = vmatprep.subr.bf16.mxu0 0
    %1476 = vmatpush1.bf16.msra.mxu0 0
    %1477 = vmatprep.subr.bf16.mxu0 0
    %1478 = vmatpush1.bf16.msra.mxu0 0
    %1479 = vmatprep.subr.bf16.mxu0 0
    %1480 = vmatpush1.bf16.msra.mxu0 0
    %1481 = vmatprep.subr.bf16.mxu0 0
    %1482 = vmatpush1.bf16.msra.mxu0 0
    %1483 = vmatprep.subr.bf16.mxu0 0
    %1484 = vmatpush1.bf16.msra.mxu0 0
    %1485 = vmatprep.mubr.bf16.mxu0 0
    %1486 = vmatmul.mubr.bf16.gmra.mrb[0].mxu0 %v1448
    %v1487 = vpop.f32.mrb[0].mxu0
    %v1488 = vadd.f32 0.0, %v1487
    %v1489 = vpop.f32.mrb[0].mxu0
    %v1490 = vpop.f32.mrb[0].mxu0
    %v1491 = vpop.f32.mrb[0].mxu0
    %1492 = vdwg.mxu0
    %v1494 = vsel %vm659, %v1399, 0
    %v1497 = vsel %vm895, %v1161, 0
    %1499 = vmatprep.subr.bf16.mxu0 0
    %1500 = vmatpush1.bf16.msra.mxu0 %v1497
    %1501 = vmatprep.subr.bf16.mxu0 0
    %1502 = vmatpush1.bf16.msra.mxu0 0
    %1503 = vmatprep.subr.bf16.mxu0 0
    %1504 = vmatpush1.bf16.msra.mxu0 0
    %1505 = vmatprep.subr.bf16.mxu0 0
    %1506 = vmatpush1.bf16.msra.mxu0 0
    %1507 = vmatprep.subr.bf16.mxu0 0
    %1508 = vmatpush1.bf16.msra.mxu0 0
    %1509 = vmatprep.subr.bf16.mxu0 0
    %1510 = vmatpush1.bf16.msra.mxu0 0
    %1511 = vmatprep.subr.bf16.mxu0 0
    %1512 = vmatpush1.bf16.msra.mxu0 0
    %1513 = vmatprep.subr.bf16.mxu0 0
    %1514 = vmatpush1.bf16.msra.mxu0 0
    %1515 = vmatprep.subr.bf16.mxu0 0
    %1516 = vmatpush1.bf16.msra.mxu0 0
    %1517 = vmatprep.subr.bf16.mxu0 0
    %1518 = vmatpush1.bf16.msra.mxu0 0
    %1519 = vmatprep.subr.bf16.mxu0 0
    %1520 = vmatpush1.bf16.msra.mxu0 0
    %1521 = vmatprep.subr.bf16.mxu0 0
    %1522 = vmatpush1.bf16.msra.mxu0 0
    %1523 = vmatprep.subr.bf16.mxu0 0
    %1524 = vmatpush1.bf16.msra.mxu0 0
    %1525 = vmatprep.subr.bf16.mxu0 0
    %1526 = vmatpush1.bf16.msra.mxu0 0
    %1527 = vmatprep.subr.bf16.mxu0 0
    %1528 = vmatpush1.bf16.msra.mxu0 0
    %1529 = vmatprep.subr.bf16.mxu0 0
    %1530 = vmatpush1.bf16.msra.mxu0 0
    %1531 = vmatprep.mubr.bf16.mxu0 0
    %1532 = vmatmul.mubr.bf16.gmra.mrb[0].mxu0 %v1494
    %v1533 = vpop.f32.mrb[0].mxu0
    %v1534 = vadd.f32 0.0, %v1533
    %v1535 = vpop.f32.mrb[0].mxu0
    %v1536 = vpop.f32.mrb[0].mxu0
    %v1537 = vpop.f32.mrb[0].mxu0
    %1538 = vdwg.mxu0
    %v1540 = vsel %vm659, %v1400, 0
    %v1543 = vsel %vm895, %v1162, 0
    %1545 = vmatprep.subr.bf16.mxu0 0
    %1546 = vmatpush1.bf16.msra.mxu0 %v1543
    %1547 = vmatprep.subr.bf16.mxu0 0
    %1548 = vmatpush1.bf16.msra.mxu0 0
    %1549 = vmatprep.subr.bf16.mxu0 0
    %1550 = vmatpush1.bf16.msra.mxu0 0
    %1551 = vmatprep.subr.bf16.mxu0 0
    %1552 = vmatpush1.bf16.msra.mxu0 0
    %1553 = vmatprep.subr.bf16.mxu0 0
    %1554 = vmatpush1.bf16.msra.mxu0 0
    %1555 = vmatprep.subr.bf16.mxu0 0
    %1556 = vmatpush1.bf16.msra.mxu0 0
    %1557 = vmatprep.subr.bf16.mxu0 0
    %1558 = vmatpush1.bf16.msra.mxu0 0
    %1559 = vmatprep.subr.bf16.mxu0 0
    %1560 = vmatpush1.bf16.msra.mxu0 0
    %1561 = vmatprep.subr.bf16.mxu0 0
    %1562 = vmatpush1.bf16.msra.mxu0 0
    %1563 = vmatprep.subr.bf16.mxu0 0
    %1564 = vmatpush1.bf16.msra.mxu0 0
    %1565 = vmatprep.subr.bf16.mxu0 0
    %1566 = vmatpush1.bf16.msra.mxu0 0
    %1567 = vmatprep.subr.bf16.mxu0 0
    %1568 = vmatpush1.bf16.msra.mxu0 0
    %1569 = vmatprep.subr.bf16.mxu0 0
    %1570 = vmatpush1.bf16.msra.mxu0 0
    %1571 = vmatprep.subr.bf16.mxu0 0
    %1572 = vmatpush1.bf16.msra.mxu0 0
    %1573 = vmatprep.subr.bf16.mxu0 0
    %1574 = vmatpush1.bf16.msra.mxu0 0
    %1575 = vmatprep.subr.bf16.mxu0 0
    %1576 = vmatpush1.bf16.msra.mxu0 0
    %1577 = vmatprep.mubr.bf16.mxu0 0
    %1578 = vmatmul.mubr.bf16.gmra.mrb[0].mxu0 %v1540
    %v1579 = vpop.f32.mrb[0].mxu0
    %v1580 = vadd.f32 0.0, %v1579
    %v1581 = vpop.f32.mrb[0].mxu0
    %v1582 = vpop.f32.mrb[0].mxu0
    %v1583 = vpop.f32.mrb[0].mxu0
    %1584 = vdwg.mxu0
    %v1585 = vpack.c.bf16 %v1442, %v1442
    %v1587 = vrot.slane %v1585, 4
    %vm1589 = vcmask 64516
    %1590 = vst.msk [vmem:[#allocation5] sm:$0xf0] %vm1589, %v1587
    %v1591 = vpack.c.bf16 %v1488, %v1488
    %v1593 = vrot.slane %v1591, 4
    %1594 = vrot.lane.b32.xlu0 %v1593, 8
    %v1595 = vpop.permute.xlu0 %1594
    %vm1597 = vcmask 130116
    %1598 = vst.msk [vmem:[#allocation5] sm:$0xf0] %vm1597, %v1595
    %v1599 = vpack.c.bf16 %v1534, %v1534
    %v1601 = vrot.slane %v1599, 4
    %1602 = vrot.lane.b32.xlu0 %v1601, 16
    %v1603 = vpop.permute.xlu0 %1602
    %vm1605 = vcmask 195716
    %1606 = vst.msk [vmem:[#allocation5] sm:$0xf0] %vm1605, %v1603
    %v1607 = vpack.c.bf16 %v1580, %v1580
    %v1609 = vrot.slane %v1607, 4
    %1610 = vrot.lane.b32.xlu0 %v1609, 24
    %v1611 = vpop.permute.xlu0 %1610
    %vm1613 = vcmask 261316
    %1614 = vst.msk [vmem:[#allocation5] sm:$0xf0] %vm1613, %v1611
    %v1615 = vld [vmem:[#allocation5] sm:$0xff]
    %v1616 = vld [vmem:[#allocation20] sm:$0xf]
    %v1617 = vld [vmem:[#allocation20 + $0x4] sm:$0xf]
    %v1618 = vld [vmem:[#allocation20 + $0x8] sm:$0xf]
    %v1619 = vld [vmem:[#allocation20 + $0xc] sm:$0xf]
    %v1620 = vld [vmem:[#allocation21] sm:$0x1]
    %v1622 = vlaneseq
    %v1623 = vshrl.u32 %v1622, 7
    %v1624 = vsub.s32 0, %v1623
    %v1625 = vrot.slane %v1620, %v1624
    %v1631 = vunpack.c.l.b16 %v1616
    %v1632 = vunpack.c.l.b16 %v1617
    %v1633 = vunpack.c.l.b16 %v1618
    %v1634 = vunpack.c.l.b16 %v1619
    %v1635 = vpack.c.b16 %v1632, %v1631
    %v1636 = vpack.c.b16 %v1634, %v1633
    %v1640 = vsel %vm324, %v1615, 0
    %1642 = vmatprep.subr.bf16.mxu0 0
    %1643 = vmatpush1.bf16.msra.mxu0 %v1635
    %1644 = vmatprep.subr.bf16.mxu0 0
    %1645 = vmatpush1.bf16.msra.mxu0 %v1636
    %1646 = vmatprep.subr.bf16.mxu0 0
    %1647 = vmatpush1.bf16.msra.mxu0 0
    %1648 = vmatprep.subr.bf16.mxu0 0
    %1649 = vmatpush1.bf16.msra.mxu0 0
    %1650 = vmatprep.subr.bf16.mxu0 0
    %1651 = vmatpush1.bf16.msra.mxu0 0
    %1652 = vmatprep.subr.bf16.mxu0 0
    %1653 = vmatpush1.bf16.msra.mxu0 0
    %1654 = vmatprep.subr.bf16.mxu0 0
    %1655 = vmatpush1.bf16.msra.mxu0 0
    %1656 = vmatprep.subr.bf16.mxu0 0
    %1657 = vmatpush1.bf16.msra.mxu0 0
    %1658 = vmatprep.subr.bf16.mxu0 0
    %1659 = vmatpush1.bf16.msra.mxu0 0
    %1660 = vmatprep.subr.bf16.mxu0 0
    %1661 = vmatpush1.bf16.msra.mxu0 0
    %1662 = vmatprep.subr.bf16.mxu0 0
    %1663 = vmatpush1.bf16.msra.mxu0 0
    %1664 = vmatprep.subr.bf16.mxu0 0
    %1665 = vmatpush1.bf16.msra.mxu0 0
    %1666 = vmatprep.subr.bf16.mxu0 0
    %1667 = vmatpush1.bf16.msra.mxu0 0
    %1668 = vmatprep.subr.bf16.mxu0 0
    %1669 = vmatpush1.bf16.msra.mxu0 0
    %1670 = vmatprep.subr.bf16.mxu0 0
    %1671 = vmatpush1.bf16.msra.mxu0 0
    %1672 = vmatprep.subr.bf16.mxu0 0
    %1673 = vmatpush1.bf16.msra.mxu0 0
    %1674 = vmatprep.mubr.bf16.mxu0 0
    %1675 = vmatmul.mubr.bf16.gmra.mrb[0].mxu0 %v1640
    %v1676 = vpop.f32.mrb[0].mxu0
    %v1677 = vadd.f32 %v1625, %v1676
    %v1678 = vpop.f32.mrb[0].mxu0
    %v1679 = vpop.f32.mrb[0].mxu0
    %v1680 = vadd.f32 %v1625, %v1679
    %v1681 = vpop.f32.mrb[0].mxu0
    %1682 = vdwg.mxu0
    %v1683 = vadd.f32 %v314, %v1677
    %v1684 = vadd.f32 %v315, %v1680
    %v1685 = vld [vmem:[#allocation32] sm:$0x1]
    %v1686 = vld [vmem:[#allocation33] sm:$0x1]
    %v1687 = vsel %vm324, %v1683, 0.0
    %1688 = vadd.xlane.f32.xlu0 %v1687
    %v1689 = vpop.xlane.xlu0 %1688
    %v1690 = vsel %vm324, %v1684, 0.0
    %1691 = vadd.xlane.f32.xlu0 %v1690
    %v1692 = vpop.xlane.xlu0 %1691
    %v1693 = vmul.f32 %v1689, %v331
    %v1694 = vmul.f32 %v1692, %v331
    %v1695 = vsub.f32 %v1683, %v1693
    %v1696 = vsub.f32 %v1684, %v1694
    %v1697 = vmul.f32 %v1695, %v1695
    %v1698 = vmul.f32 %v1696, %v1696
    %v1699 = vsel %vm324, %v1697, 0.0
    %1700 = vadd.xlane.f32.xlu0 %v1699
    %v1701 = vpop.xlane.xlu0 %1700
    %v1702 = vsel %vm324, %v1698, 0.0
    %1703 = vadd.xlane.f32.xlu0 %v1702
    %v1704 = vpop.xlane.xlu0 %1703
    %v1705 = vmul.f32 %v1701, 0.032258064
    %v1706 = vmul.f32 %v1704, 0.032258064
    %v1707 = vrsqrt.pop %v1705
    %v1708 = vmul.f32 %v1705, %v1707
    %vm1709 = vcmp.eq.f32.partialorder %v1705, inf
    %v1710 = vsel %vm1709, %v1705, %v1708
    %vm1711 = vcmp.eq.f32.partialorder %v1705, 0.0
    %v1712 = vand.u32 %v1705, 2147483648
    %v1713 = vsel %vm1711, %v1712, %v1710
    %v1714 = vrsqrt.pop %v1706
    %v1715 = vmul.f32 %v1706, %v1714
    %vm1716 = vcmp.eq.f32.partialorder %v1706, inf
    %v1717 = vsel %vm1716, %v1706, %v1715
    %vm1718 = vcmp.eq.f32.partialorder %v1706, 0.0
    %v1719 = vand.u32 %v1706, 2147483648
    %v1720 = vsel %vm1718, %v1719, %v1717
    %v1721 = vadd.f32 %v1713, 1e-06
    %v1722 = vadd.f32 %v1720, 1e-06
    %v1723 = vrcp.pop %v1721
    %v1724 = vrcp.pop %v1722
    %v1725 = vmul.f32 %v1695, %v1723
    %v1726 = vmul.f32 %v1696, %v1724
    %v1728 = vlaneseq
    %v1729 = vshrl.u32 %v1728, 7
    %v1730 = vsub.s32 0, %v1729
    %v1731 = vrot.slane %v1685, %v1730
    %v1733 = vmul.f32 %v1731, %v1725
    %v1734 = vmul.f32 %v1731, %v1726
    %v1736 = vlaneseq
    %v1737 = vshrl.u32 %v1736, 7
    %v1738 = vsub.s32 0, %v1737
    %v1739 = vrot.slane %v1686, %v1738
    %v1741 = vadd.f32 %v1733, %v1739
    %v1742 = vadd.f32 %v1734, %v1739
    %v1743 = vpack.c.bf16 %v1742, %v1741
    %v1744 = vld [vmem:[#allocation23] sm:$0xf]
    %v1745 = vld [vmem:[#allocation23 + $0x4] sm:$0xf]
    %v1746 = vld [vmem:[#allocation23 + $0x8] sm:$0xf]
    %v1747 = vld [vmem:[#allocation23 + $0xc] sm:$0xf]
    %v1748 = vld [vmem:[#allocation24] sm:$0x1]
    %v1750 = vlaneseq
    %v1751 = vshrl.u32 %v1750, 7
    %v1752 = vsub.s32 0, %v1751
    %v1753 = vrot.slane %v1748, %v1752
    %v1759 = vunpack.c.l.b16 %v1744
    %v1760 = vunpack.c.l.b16 %v1745
    %v1761 = vunpack.c.l.b16 %v1746
    %v1762 = vunpack.c.l.b16 %v1747
    %v1763 = vpack.c.b16 %v1760, %v1759
    %v1764 = vpack.c.b16 %v1762, %v1761
    %v1768 = vsel %vm324, %v1743, 0
    %1770 = vmatprep.subr.bf16.mxu0 0
    %1771 = vmatpush1.bf16.msra.mxu0 %v1763
    %1772 = vmatprep.subr.bf16.mxu0 0
    %1773 = vmatpush1.bf16.msra.mxu0 %v1764
    %1774 = vmatprep.subr.bf16.mxu0 0
    %1775 = vmatpush1.bf16.msra.mxu0 0
    %1776 = vmatprep.subr.bf16.mxu0 0
    %1777 = vmatpush1.bf16.msra.mxu0 0
    %1778 = vmatprep.subr.bf16.mxu0 0
    %1779 = vmatpush1.bf16.msra.mxu0 0
    %1780 = vmatprep.subr.bf16.mxu0 0
    %1781 = vmatpush1.bf16.msra.mxu0 0
    %1782 = vmatprep.subr.bf16.mxu0 0
    %1783 = vmatpush1.bf16.msra.mxu0 0
    %1784 = vmatprep.subr.bf16.mxu0 0
    %1785 = vmatpush1.bf16.msra.mxu0 0
    %1786 = vmatprep.subr.bf16.mxu0 0
    %1787 = vmatpush1.bf16.msra.mxu0 0
    %1788 = vmatprep.subr.bf16.mxu0 0
    %1789 = vmatpush1.bf16.msra.mxu0 0
    %1790 = vmatprep.subr.bf16.mxu0 0
    %1791 = vmatpush1.bf16.msra.mxu0 0
    %1792 = vmatprep.subr.bf16.mxu0 0
    %1793 = vmatpush1.bf16.msra.mxu0 0
    %1794 = vmatprep.subr.bf16.mxu0 0
    %1795 = vmatpush1.bf16.msra.mxu0 0
    %1796 = vmatprep.subr.bf16.mxu0 0
    %1797 = vmatpush1.bf16.msra.mxu0 0
    %1798 = vmatprep.subr.bf16.mxu0 0
    %1799 = vmatpush1.bf16.msra.mxu0 0
    %1800 = vmatprep.subr.bf16.mxu0 0
    %1801 = vmatpush1.bf16.msra.mxu0 0
    %1802 = vmatprep.mubr.bf16.mxu0 0
    %1803 = vmatmul.mubr.bf16.gmra.mrb[0].mxu0 %v1768
    %v1804 = vpop.f32.mrb[0].mxu0
    %v1805 = vadd.f32 %v1753, %v1804
    %v1806 = vpop.f32.mrb[0].mxu0
    %v1807 = vpop.f32.mrb[0].mxu0
    %v1808 = vadd.f32 %v1753, %v1807
    %v1809 = vpop.f32.mrb[0].mxu0
    %1810 = vdwg.mxu0
    %v1811 = vmax.f32 %v1805, 0.0
    %v1812 = vmax.f32 %v1808, 0.0
    %v1813 = vpack.c.bf16 %v1812, %v1811
    %v1814 = vld [vmem:[#allocation26] sm:$0xf]
    %v1815 = vld [vmem:[#allocation26 + $0x4] sm:$0xf]
    %v1816 = vld [vmem:[#allocation26 + $0x8] sm:$0xf]
    %v1817 = vld [vmem:[#allocation26 + $0xc] sm:$0xf]
    %v1818 = vld [vmem:[#allocation26 + $0x10] sm:$0xf]
    %v1819 = vld [vmem:[#allocation26 + $0x14] sm:$0xf]
    %v1820 = vld [vmem:[#allocation26 + $0x18] sm:$0xf]
    %v1821 = vld [vmem:[#allocation26 + $0x1c] sm:$0xf]
    %v1822 = vld [vmem:[#allocation27] sm:$0x1]
    %v1824 = vlaneseq
    %v1825 = vshrl.u32 %v1824, 7
    %v1826 = vsub.s32 0, %v1825
    %v1827 = vrot.slane %v1822, %v1826
    %v1837 = vunpack.c.l.b16 %v1814
    %v1838 = vunpack.c.l.b16 %v1815
    %v1839 = vunpack.c.l.b16 %v1816
    %v1840 = vunpack.c.l.b16 %v1817
    %v1841 = vunpack.c.l.b16 %v1818
    %v1842 = vunpack.c.l.b16 %v1819
    %v1843 = vunpack.c.l.b16 %v1820
    %v1844 = vunpack.c.l.b16 %v1821
    %v1845 = vpack.c.b16 %v1838, %v1837
    %v1846 = vpack.c.b16 %v1840, %v1839
    %v1847 = vpack.c.b16 %v1842, %v1841
    %v1848 = vpack.c.b16 %v1844, %v1843
    %vm1853 = vcmask 523264
    %v1855 = vsel %vm1853, %v1813, 0
    %1857 = vmatprep.subr.bf16.mxu0 0
    %1858 = vmatpush1.bf16.msra.mxu0 %v1845
    %1859 = vmatprep.subr.bf16.mxu0 0
    %1860 = vmatpush1.bf16.msra.mxu0 %v1846
    %1861 = vmatprep.subr.bf16.mxu0 0
    %1862 = vmatpush1.bf16.msra.mxu0 %v1847
    %1863 = vmatprep.subr.bf16.mxu0 0
    %1864 = vmatpush1.bf16.msra.mxu0 %v1848
    %1865 = vmatprep.subr.bf16.mxu0 0
    %1866 = vmatpush1.bf16.msra.mxu0 0
    %1867 = vmatprep.subr.bf16.mxu0 0
    %1868 = vmatpush1.bf16.msra.mxu0 0
    %1869 = vmatprep.subr.bf16.mxu0 0
    %1870 = vmatpush1.bf16.msra.mxu0 0
    %1871 = vmatprep.subr.bf16.mxu0 0
    %1872 = vmatpush1.bf16.msra.mxu0 0
    %1873 = vmatprep.subr.bf16.mxu0 0
    %1874 = vmatpush1.bf16.msra.mxu0 0
    %1875 = vmatprep.subr.bf16.mxu0 0
    %1876 = vmatpush1.bf16.msra.mxu0 0
    %1877 = vmatprep.subr.bf16.mxu0 0
    %1878 = vmatpush1.bf16.msra.mxu0 0
    %1879 = vmatprep.subr.bf16.mxu0 0
    %1880 = vmatpush1.bf16.msra.mxu0 0
    %1881 = vmatprep.subr.bf16.mxu0 0
    %1882 = vmatpush1.bf16.msra.mxu0 0
    %1883 = vmatprep.subr.bf16.mxu0 0
    %1884 = vmatpush1.bf16.msra.mxu0 0
    %1885 = vmatprep.subr.bf16.mxu0 0
    %1886 = vmatpush1.bf16.msra.mxu0 0
    %1887 = vmatprep.subr.bf16.mxu0 0
    %1888 = vmatpush1.bf16.msra.mxu0 0
    %1889 = vmatprep.mubr.bf16.mxu0 0
    %1890 = vmatmul.mubr.bf16.gmra.mrb[0].mxu0 %v1855
    %v1891 = vpop.f32.mrb[0].mxu0
    %v1892 = vadd.f32 %v1827, %v1891
    %v1893 = vpop.f32.mrb[0].mxu0
    %v1894 = vpop.f32.mrb[0].mxu0
    %v1895 = vadd.f32 %v1827, %v1894
    %v1896 = vpop.f32.mrb[0].mxu0
    %1897 = vdwg.mxu0
    %v1898 = vadd.f32 %v1683, %v1892
    %v1899 = vadd.f32 %v1684, %v1895
    %1900 = vst.msk [vmem:[#allocation38] sm:$0xff] %vm324, %v1898
    %1901 = vst.msk [vmem:[#allocation38 + $0x8] sm:$0xff] %vm324, %v1899
    // Predicated region
    $region162: #{tpu_custom_call.1} parent=1 // pred_check
      _
    $region163: #{tpu_custom_call.1} parent=1 // pred_check_branch
      %1903 = sbr.rel (0) target = $region165
    $region164: #{tpu_custom_call.1} parent=1 // pred_region
      %s1905 = ssub.s32 256, 256
      %1906 = vsyncadd [#allocation8], %s1905
      %s1907 = sshll.u32 [#allocation38], 4
      %s1908 = int_to_ptr.vmem [resolvable:$true] %s1907
      %1913 = dma.vmem_to_hbm [thread:$0]  %s1908, 256, %s20, [#allocation8], 128, 128, 8
    $region165: #{tpu_custom_call.1} parent=1 // pred_fallthru
      _
    // Predicated region
    $region166: #{tpu_custom_call.1} parent=1 // pred_check
      _
    $region167: #{tpu_custom_call.1} parent=1 // pred_check_branch
      %1915 = sbr.rel (0) target = $region169
    $region168: #{tpu_custom_call.1} parent=1 // pred_region
      %1916 = dma.done [#allocation8], 256
    $region169: #{tpu_custom_call.1} parent=1 // pred_fallthru
      _
    %1917 = vsyncpa [#allocation7], 1
    %1918 = vsyncpa [#allocation10], 1
    %1919 = vsyncpa [#allocation13], 1
    %1920 = vsyncpa [#allocation16], 1
    %1921 = vsyncpa [#allocation19], 1
    %1922 = vsyncpa [#allocation22], 1
    %1923 = vsyncpa [#allocation25], 1
    %1924 = vsyncpa [#allocation28], 1
    %1925 = vsyncpa [#allocation31], 1
    %1926 = vsyncpa [#allocation34], 1
    %1927 = vsyncpa [#allocation37], 1
    %1928 = vsyncpa [#allocation8], 1

</llo_original>
